<compile_context>
chip_gen: v7x
topology: tpu7x:2x2x1
jax: 0.10.0
libtpu: 0.0.40
codegen_flags: <defaults>
</compile_context>

<pallas_src>
import jax
import jax.numpy as jnp
import numpy as np
from jax.experimental import pallas as pl
from jax.experimental.pallas import tpu as pltpu


def partial_down_conv(x_nchw, mask_nchw, params, *, pooling=True,
                      pool_factor=2, group_size=4):
    """Forward pass of PartialDownConv (NCHW in / NCHW out).

    Returns (x_pooled, pre_pool, mask_pooled) like the PyTorch module.
    params: w1 (3,3,Cin,Cout) HWIO, b1 (Cout,), w2 (3,3,Cout,Cout), b2 (Cout,),
            gamma (Cout,), beta (Cout,)  -- GroupNorm affine.
    """
    f32 = jnp.float32
    w1, b1, w2, b2, gamma, beta = (params[k] for k in
                                   ("w1", "b1", "w2", "b2", "gamma", "beta"))
    N, Cin, H, W = x_nchw.shape
    Cout = w1.shape[-1]
    pf = pool_factor
    assert H % pf == 0 and W % pf == 0, "spatial dims must be divisible by pool_factor"
    ngroups = int(max(1, Cout // group_size))
    assert Cout % ngroups == 0, "GroupNorm requires Cout divisible by num_groups"
    gs = Cout // ngroups

    Hp, Wp = H + 2, W + 2            # zero-padded spatial dims (3x3 conv, padding=1)
    HWw = H * Wp                     # "wide" flattened spatial extent (2 junk cols per row)
    FL = Hp * Wp + 2                 # flat padded-input length (+2 so every tap slice is in range)
    C1 = Cin + 1                     # conv1 input channels (+1 mask channel)
    C2 = Cout + 1                    # conv2 input channels (+1 mask channel)
    K1, K2 = 9 * C1, 9 * C2
    Ho, Wo = H // pf, W // pf
    NP = Ho * Wo
    PIN = HWw + (pf - 1) * (Wp + 1)  # maxpool staging width (largest shift + HWw)

    x = x_nchw.astype(f32)
    m = mask_nchw.astype(f32)

    # --- tiny input-side glue: [x*m, m] channels, zero-pad by 1, flatten rows, +2 tail zeros ---
    xe = jnp.concatenate([x * m, m], axis=1)                       # (N, C1, H, W)
    xe = jnp.pad(xe, ((0, 0), (0, 0), (1, 1), (1, 1)))             # (N, C1, Hp, Wp)
    xflat = jnp.pad(xe.reshape(N, C1, Hp * Wp), ((0, 0), (0, 0), (0, 2)))   # (N, C1, FL)

    # --- extended weight matrices: rows < Cout are the conv weights (on the data channels),
    #     row Cout has 1/9 on the mask channel -> that matmul row IS update_mask. ---
    def ext_weight(w_hwio, cin):
        wt = jnp.transpose(w_hwio.astype(f32), (3, 0, 1, 2)).reshape(Cout, 9, cin)
        wt = jnp.concatenate([wt, jnp.zeros((Cout, 9, 1), f32)], axis=-1)
        mrow = jnp.zeros((1, 9, cin + 1), f32).at[:, :, cin].set(1.0 / 9.0)
        return jnp.concatenate([wt, mrow], axis=0).reshape(Cout + 1, 9 * (cin + 1))

    w1e = ext_weight(w1, Cin)                                      # (Cout+1, K1)
    w2e = ext_weight(w2, Cout)                                     # (Cout+1, K2)
    b1c = b1.astype(f32).reshape(Cout, 1)
    b2c = b2.astype(f32).reshape(Cout, 1)
    gamc = gamma.astype(f32).reshape(Cout, 1)
    betc = beta.astype(f32).reshape(Cout, 1)

    # --- trace-time constants: validity of wide columns + one-hot pool-selection matrix ---
    col = np.arange(HWw) % Wp
    valid_np = (col < W).astype(np.float32).reshape(1, HWw)
    spool_np = np.zeros((HWw, NP), np.float32)
    q = np.arange(NP)
    spool_np[(q // Wo) * pf * Wp + (q % Wo) * pf, q] = 1.0
    valid = jnp.asarray(valid_np)
    spool = jnp.asarray(spool_np)

    def kernel(x_ref, w1_ref, b1_ref, gam_ref, bet_ref, w2_ref, b2_ref,
               valid_ref, spool_ref, wide_ref, pooled_ref,
               patch_ref, cpad_ref, pin_ref):
        validv = valid_ref[...]                                     # (1, HWw)

        # ---- conv1: im2col patch assembly in VMEM + ONE lane-dense MXU matmul ----
        for ky in range(3):
            for kx in range(3):
                t = ky * 3 + kx
                off = ky * Wp + kx
                patch_ref[t * C1:(t + 1) * C1, :] = x_ref[0, :, off:off + HWw]
        r1 = jnp.dot(w1_ref[...], patch_ref[0:K1, :],
                     preferred_element_type=jnp.float32)            # (Cout+1, HWw)
        upd1 = r1[Cout:Cout + 1, :]                                  # update_mask row
        bin1 = (upd1 >= 0.01).astype(jnp.float32) * validv           # also zeroes junk cols
        x1 = (r1[0:Cout, :] * pl.reciprocal(upd1 + 1e-8, approx=True)
              + b1_ref[...]) * bin1                                  # partial-conv1 output

        # ---- GroupNorm + ReLU + re-mask, written straight into conv2's zero-padded flat input ----
        cpad_ref[...] = jnp.zeros_like(cpad_ref)
        inv_cnt = 1.0 / float(gs * H * W)
        for g in range(ngroups):
            seg = x1[g * gs:(g + 1) * gs, :]                         # junk cols are exactly 0
            ssum = jnp.sum(jnp.sum(seg, axis=1, keepdims=True), axis=0, keepdims=True)
            sqsum = jnp.sum(jnp.sum(seg * seg, axis=1, keepdims=True), axis=0, keepdims=True)
            mean = ssum * inv_cnt
            var = jnp.maximum(sqsum * inv_cnt - mean * mean, 0.0)
            inv = jax.lax.rsqrt(var + 1e-5)
            gn = (seg - mean) * inv * gam_ref[g * gs:(g + 1) * gs, :] \
                 + bet_ref[g * gs:(g + 1) * gs, :]
            cpad_ref[g * gs:(g + 1) * gs, Wp + 1:Wp + 1 + HWw] = jnp.maximum(gn, 0.0) * bin1
        cpad_ref[Cout:Cout + 1, Wp + 1:Wp + 1 + HWw] = bin1          # conv2 mask channel

        # ---- conv2: same single im2col matmul, its input never leaves VMEM ----
        for ky in range(3):
            for kx in range(3):
                t = ky * 3 + kx
                off = ky * Wp + kx
                patch_ref[t * C2:(t + 1) * C2, :] = cpad_ref[:, off:off + HWw]
        r2 = jnp.dot(w2_ref[...], patch_ref[...],
                     preferred_element_type=jnp.float32)             # (Cout+1, HWw)
        upd2 = r2[Cout:Cout + 1, :]
        bin2 = (upd2 >= 0.01).astype(jnp.float32)
        x2 = jnp.maximum((r2[0:Cout, :] * pl.reciprocal(upd2 + 1e-8, approx=True)
                          + b2_ref[...]) * bin2, 0.0)                # ReLU -> pre_pool (wide)

        wide_ref[0, 0:Cout, :] = x2
        wide_ref[0, Cout:Cout + 1, :] = bin2

        # ---- fused pf x pf maxpool: shifted max in the wide layout + one-hot selection matmul ----
        pin_ref[...] = jnp.zeros_like(pin_ref)
        pin_ref[0:Cout, 0:HWw] = x2
        pin_ref[Cout:Cout + 1, 0:HWw] = bin2
        mx = pin_ref[:, 0:HWw]
        for dy in range(pf):
            for dx in range(pf):
                if dy == 0 and dx == 0:
                    continue
                o = dy * Wp + dx
                mx = jnp.maximum(mx, pin_ref[:, o:o + HWw])
        pooled_ref[0] = jnp.dot(mx, spool_ref[...], preferred_element_type=jnp.float32)

    grid_spec = pltpu.PrefetchScalarGridSpec(
        num_scalar_prefetch=0,
        grid=(N,),
        in_specs=[
            pl.BlockSpec((1, C1, FL), lambda n: (n, 0, 0)),
            pl.BlockSpec((Cout + 1, K1), lambda n: (0, 0)),
            pl.BlockSpec((Cout, 1), lambda n: (0, 0)),
            pl.BlockSpec((Cout, 1), lambda n: (0, 0)),
            pl.BlockSpec((Cout, 1), lambda n: (0, 0)),
            pl.BlockSpec((Cout + 1, K2), lambda n: (0, 0)),
            pl.BlockSpec((Cout, 1), lambda n: (0, 0)),
            pl.BlockSpec((1, HWw), lambda n: (0, 0)),
            pl.BlockSpec((HWw, NP), lambda n: (0, 0)),
        ],
        out_specs=[
            pl.BlockSpec((1, Cout + 1, HWw), lambda n: (n, 0, 0)),
            pl.BlockSpec((1, Cout + 1, NP), lambda n: (n, 0, 0)),
        ],
        scratch_shapes=[
            pltpu.VMEM((K2, HWw), jnp.float32),       # shared im2col patch buffer
            pltpu.VMEM((C2, FL), jnp.float32),        # conv2's zero-padded flat input
            pltpu.VMEM((C2, PIN), jnp.float32),       # maxpool staging buffer
        ],
    )

    wide, pooled = pl.pallas_call(
        kernel,
        out_shape=(jax.ShapeDtypeStruct((N, Cout + 1, HWw), f32),
                   jax.ShapeDtypeStruct((N, Cout + 1, NP), f32)),
        grid_spec=grid_spec,
        compiler_params=pltpu.CompilerParams(dimension_semantics=("parallel",)),
    )(xflat, w1e, b1c, gamc, betc, w2e, b2c, valid, spool)

    # --- tiny output-side glue: drop the 2 junk columns per row, split channels, reshape ---
    wide = wide.reshape(N, Cout + 1, H, Wp)[:, :, :, :W]
    pre_pool = wide[:, :Cout]                                        # (N, Cout, H, W)
    if pooling:
        x_out = pooled[:, :Cout].reshape(N, Cout, Ho, Wo)
        m_out = pooled[:, Cout:].reshape(N, 1, Ho, Wo)
    else:
        x_out = pre_pool
        m_out = wide[:, Cout:Cout + 1]                               # (N, 1, H, W)
    return x_out, pre_pool, m_out


def _reference_partial_down_conv(x, mask, params, *, pooling=True,
                                 pool_factor=2, group_size=4):
    """Pure-JAX (XLA) reference with identical semantics, for a sanity check."""
    f32 = jnp.float32
    w1, b1, w2, b2, gamma, beta = (params[k] for k in
                                   ("w1", "b1", "w2", "b2", "gamma", "beta"))
    dn = ("NCHW", "HWIO", "NCHW")
    hi = jax.lax.Precision.HIGHEST

    def pconv(inp, msk, w, b):
        upd = jax.lax.conv_general_dilated(
            msk, jnp.ones((3, 3, 1, 1), f32), (1, 1), "SAME",
            dimension_numbers=dn, precision=hi) / 9.0
        binm = (upd >= 0.01).astype(f32)
        raw = jax.lax.conv_general_dilated(
            inp * msk, w.astype(f32), (1, 1), "SAME",
            dimension_numbers=dn, precision=hi)
        out = (raw / (upd + 1e-8) + b.reshape(1, -1, 1, 1)) * binm
        return out, binm

    x = x.astype(f32)
    mask = mask.astype(f32)
    x1, m1 = pconv(x, mask, w1, b1)
    N, C, H, W = x1.shape
    ng = int(max(1, C // group_size))
    xg = x1.reshape(N, ng, C // ng, H, W)
    mu = xg.mean(axis=(2, 3, 4), keepdims=True)
    var = xg.var(axis=(2, 3, 4), keepdims=True)
    xh = ((xg - mu) / jnp.sqrt(var + 1e-5)).reshape(N, C, H, W)
    x1n = jax.nn.relu(xh * gamma.reshape(1, -1, 1, 1) + beta.reshape(1, -1, 1, 1))
    x2, m2 = pconv(x1n, m1, w2, b2)
    x2 = jax.nn.relu(x2)
    pre = x2
    if pooling:
        x2 = x2.reshape(N, C, H // pool_factor, pool_factor,
                        W // pool_factor, pool_factor).max(axis=(3, 5))
        m2 = m2.reshape(N, 1, H // pool_factor, pool_factor,
                        W // pool_factor, pool_factor).max(axis=(3, 5))
    return x2, pre, m2


if __name__ == "__main__":
    key = jax.random.PRNGKey(0)
    k1, k2, k3, k4, k5, k6, kx, km = jax.random.split(key, 8)

    N, Cin, Cout, H, W = 2, 4, 8, 16, 16
    params = dict(
        w1=0.2 * jax.random.normal(k1, (3, 3, Cin, Cout), jnp.float32),
        b1=0.1 * jax.random.normal(k2, (Cout,), jnp.float32),
        w2=0.2 * jax.random.normal(k3, (3, 3, Cout, Cout), jnp.float32),
        b2=0.1 * jax.random.normal(k4, (Cout,), jnp.float32),
        gamma=1.0 + 0.1 * jax.random.normal(k5, (Cout,), jnp.float32),
        beta=0.1 * jax.random.normal(k6, (Cout,), jnp.float32),
    )
    x = jax.random.normal(kx, (N, Cin, H, W), jnp.float32)
    mask = (jax.random.uniform(km, (N, 1, H, W)) > 0.3).astype(jnp.float32)

    fwd = jax.jit(lambda xx, mm, pp: partial_down_conv(xx, mm, pp))
    x_pool, pre_pool, mask_pool = fwd(x, mask, params)
    jax.block_until_ready((x_pool, pre_pool, mask_pool))

    assert x_pool.shape == (N, Cout, H // 2, W // 2)
    assert pre_pool.shape == (N, Cout, H, W)
    assert mask_pool.shape == (N, 1, H // 2, W // 2)

    # Sanity check against the pure-JAX reference (loose tol: approx reciprocal in the kernel).
    rx, rpre, rm = _reference_partial_down_conv(x, mask, params)
    for got, ref, name in ((x_pool, rx, "x_pool"), (pre_pool, rpre, "pre_pool"),
                           (mask_pool, rm, "mask_pool")):
        max_err = float(jnp.max(jnp.abs(got - ref)))
        assert bool(jnp.allclose(got, ref, rtol=5e-2, atol=5e-2)), \
            f"{name} mismatch, max|diff|={max_err}"

    print("KERNEL_OK")
</pallas_src>

<mosaic_0001>
module attributes {stable_mosaic.version = 11 : i64} {
  func.func @kernel(%arg0: i32, %arg1: memref<1x5x326xf32, #tpu.memory_space<vmem>>, %arg2: memref<9x45xf32, #tpu.memory_space<vmem>>, %arg3: memref<8x1xf32, #tpu.memory_space<vmem>>, %arg4: memref<8x1xf32, #tpu.memory_space<vmem>>, %arg5: memref<8x1xf32, #tpu.memory_space<vmem>>, %arg6: memref<9x81xf32, #tpu.memory_space<vmem>>, %arg7: memref<8x1xf32, #tpu.memory_space<vmem>>, %arg8: memref<1x288xf32, #tpu.memory_space<vmem>>, %arg9: memref<288x64xf32, #tpu.memory_space<vmem>>, %arg10: memref<1x9x288xf32, #tpu.memory_space<vmem>>, %arg11: memref<1x9x64xf32, #tpu.memory_space<vmem>>, %arg12: memref<81x288xf32, #tpu.memory_space<vmem>>, %arg13: memref<9x326xf32, #tpu.memory_space<vmem>>, %arg14: memref<9x307xf32, #tpu.memory_space<vmem>>) attributes {dimension_semantics = [#tpu.dimension_semantics<parallel>], iteration_bounds = array<i64: 2>, scalar_prefetch = 0 : i64, scratch_operands = 3 : i64, tpu.core_type = #tpu.core_type<tc>, window_params = [{transform_indices = @transform_0, window_bounds = array<i64: 1, 5, 326>}, {pipeline_mode = #tpu.pipeline_mode<synchronous>, transform_indices = @transform_1, window_bounds = array<i64: 9, 45>}, {pipeline_mode = #tpu.pipeline_mode<synchronous>, transform_indices = @transform_2, window_bounds = array<i64: 8, 1>}, {pipeline_mode = #tpu.pipeline_mode<synchronous>, transform_indices = @transform_3, window_bounds = array<i64: 8, 1>}, {pipeline_mode = #tpu.pipeline_mode<synchronous>, transform_indices = @transform_4, window_bounds = array<i64: 8, 1>}, {pipeline_mode = #tpu.pipeline_mode<synchronous>, transform_indices = @transform_5, window_bounds = array<i64: 9, 81>}, {pipeline_mode = #tpu.pipeline_mode<synchronous>, transform_indices = @transform_6, window_bounds = array<i64: 8, 1>}, {pipeline_mode = #tpu.pipeline_mode<synchronous>, transform_indices = @transform_7, window_bounds = array<i64: 1, 288>}, {pipeline_mode = #tpu.pipeline_mode<synchronous>, transform_indices = @transform_8, window_bounds = array<i64: 288, 64>}, {transform_indices = @transform_9, window_bounds = array<i64: 1, 9, 288>}, {transform_indices = @transform_10, window_bounds = array<i64: 1, 9, 64>}]} {
    %c0 = arith.constant 0 : index
    %c0_0 = arith.constant 0 : index
    %0 = vector.load %arg8[%c0, %c0_0] : memref<1x288xf32, #tpu.memory_space<vmem>>, vector<1x288xf32>
    %c0_1 = arith.constant 0 : index
    %c0_2 = arith.constant 0 : index
    %c0_3 = arith.constant 0 : index
    %1 = vector.load %arg1[%c0_1, %c0_2, %c0_3] : memref<1x5x326xf32, #tpu.memory_space<vmem>>, vector<1x5x288xf32>
    %2 = vector.shape_cast %1 : vector<1x5x288xf32> to vector<5x288xf32>
    %c0_4 = arith.constant 0 : index
    %c0_5 = arith.constant 0 : index
    %3 = vector.load %arg12[%c0_4, %c0_5] : memref<81x288xf32, #tpu.memory_space<vmem>>, vector<5x288xf32>
    tpu.vector_store %arg12[%c0_4, %c0_5], %2 {strides = array<i32>} : memref<81x288xf32, #tpu.memory_space<vmem>>, vector<5x288xf32>,
    %c0_6 = arith.constant 0 : index
    %c0_7 = arith.constant 0 : index
    %c1 = arith.constant 1 : index
    %4 = vector.load %arg1[%c0_6, %c0_7, %c1] : memref<1x5x326xf32, #tpu.memory_space<vmem>>, vector<1x5x288xf32>
    %5 = vector.shape_cast %4 : vector<1x5x288xf32> to vector<5x288xf32>
    %c5 = arith.constant 5 : index
    %c0_8 = arith.constant 0 : index
    %6 = vector.load %arg12[%c5, %c0_8] : memref<81x288xf32, #tpu.memory_space<vmem>>, vector<5x288xf32>
    tpu.vector_store %arg12[%c5, %c0_8], %5 {strides = array<i32>} : memref<81x288xf32, #tpu.memory_space<vmem>>, vector<5x288xf32>,
    %c0_9 = arith.constant 0 : index
    %c0_10 = arith.constant 0 : index
    %c2 = arith.constant 2 : index
    %7 = vector.load %arg1[%c0_9, %c0_10, %c2] : memref<1x5x326xf32, #tpu.memory_space<vmem>>, vector<1x5x288xf32>
    %8 = vector.shape_cast %7 : vector<1x5x288xf32> to vector<5x288xf32>
    %c10 = arith.constant 10 : index
    %c0_11 = arith.constant 0 : index
    %9 = vector.load %arg12[%c10, %c0_11] : memref<81x288xf32, #tpu.memory_space<vmem>>, vector<5x288xf32>
    tpu.vector_store %arg12[%c10, %c0_11], %8 {strides = array<i32>} : memref<81x288xf32, #tpu.memory_space<vmem>>, vector<5x288xf32>,
    %c0_12 = arith.constant 0 : index
    %c0_13 = arith.constant 0 : index
    %c18 = arith.constant 18 : index
    %10 = vector.load %arg1[%c0_12, %c0_13, %c18] : memref<1x5x326xf32, #tpu.memory_space<vmem>>, vector<1x5x288xf32>
    %11 = vector.shape_cast %10 : vector<1x5x288xf32> to vector<5x288xf32>
    %c15 = arith.constant 15 : index
    %c0_14 = arith.constant 0 : index
    %12 = vector.load %arg12[%c15, %c0_14] : memref<81x288xf32, #tpu.memory_space<vmem>>, vector<5x288xf32>
    tpu.vector_store %arg12[%c15, %c0_14], %11 {strides = array<i32>} : memref<81x288xf32, #tpu.memory_space<vmem>>, vector<5x288xf32>,
    %c0_15 = arith.constant 0 : index
    %c0_16 = arith.constant 0 : index
    %c19 = arith.constant 19 : index
    %13 = vector.load %arg1[%c0_15, %c0_16, %c19] : memref<1x5x326xf32, #tpu.memory_space<vmem>>, vector<1x5x288xf32>
    %14 = vector.shape_cast %13 : vector<1x5x288xf32> to vector<5x288xf32>
    %c20 = arith.constant 20 : index
    %c0_17 = arith.constant 0 : index
    %15 = vector.load %arg12[%c20, %c0_17] : memref<81x288xf32, #tpu.memory_space<vmem>>, vector<5x288xf32>
    tpu.vector_store %arg12[%c20, %c0_17], %14 {strides = array<i32>} : memref<81x288xf32, #tpu.memory_space<vmem>>, vector<5x288xf32>,
    %c0_18 = arith.constant 0 : index
    %c0_19 = arith.constant 0 : index
    %c20_20 = arith.constant 20 : index
    %16 = vector.load %arg1[%c0_18, %c0_19, %c20_20] : memref<1x5x326xf32, #tpu.memory_space<vmem>>, vector<1x5x288xf32>
    %17 = vector.shape_cast %16 : vector<1x5x288xf32> to vector<5x288xf32>
    %c25 = arith.constant 25 : index
    %c0_21 = arith.constant 0 : index
    %18 = vector.load %arg12[%c25, %c0_21] : memref<81x288xf32, #tpu.memory_space<vmem>>, vector<5x288xf32>
    tpu.vector_store %arg12[%c25, %c0_21], %17 {strides = array<i32>} : memref<81x288xf32, #tpu.memory_space<vmem>>, vector<5x288xf32>,
    %c0_22 = arith.constant 0 : index
    %c0_23 = arith.constant 0 : index
    %c36 = arith.constant 36 : index
    %19 = vector.load %arg1[%c0_22, %c0_23, %c36] : memref<1x5x326xf32, #tpu.memory_space<vmem>>, vector<1x5x288xf32>
    %20 = vector.shape_cast %19 : vector<1x5x288xf32> to vector<5x288xf32>
    %c30 = arith.constant 30 : index
    %c0_24 = arith.constant 0 : index
    %21 = vector.load %arg12[%c30, %c0_24] : memref<81x288xf32, #tpu.memory_space<vmem>>, vector<5x288xf32>
    tpu.vector_store %arg12[%c30, %c0_24], %20 {strides = array<i32>} : memref<81x288xf32, #tpu.memory_space<vmem>>, vector<5x288xf32>,
    %c0_25 = arith.constant 0 : index
    %c0_26 = arith.constant 0 : index
    %c37 = arith.constant 37 : index
    %22 = vector.load %arg1[%c0_25, %c0_26, %c37] : memref<1x5x326xf32, #tpu.memory_space<vmem>>, vector<1x5x288xf32>
    %23 = vector.shape_cast %22 : vector<1x5x288xf32> to vector<5x288xf32>
    %c35 = arith.constant 35 : index
    %c0_27 = arith.constant 0 : index
    %24 = vector.load %arg12[%c35, %c0_27] : memref<81x288xf32, #tpu.memory_space<vmem>>, vector<5x288xf32>
    tpu.vector_store %arg12[%c35, %c0_27], %23 {strides = array<i32>} : memref<81x288xf32, #tpu.memory_space<vmem>>, vector<5x288xf32>,
    %c0_28 = arith.constant 0 : index
    %c0_29 = arith.constant 0 : index
    %c38 = arith.constant 38 : index
    %25 = vector.load %arg1[%c0_28, %c0_29, %c38] : memref<1x5x326xf32, #tpu.memory_space<vmem>>, vector<1x5x288xf32>
    %26 = vector.shape_cast %25 : vector<1x5x288xf32> to vector<5x288xf32>
    %c40 = arith.constant 40 : index
    %c0_30 = arith.constant 0 : index
    %27 = vector.load %arg12[%c40, %c0_30] : memref<81x288xf32, #tpu.memory_space<vmem>>, vector<5x288xf32>
    tpu.vector_store %arg12[%c40, %c0_30], %26 {strides = array<i32>} : memref<81x288xf32, #tpu.memory_space<vmem>>, vector<5x288xf32>,
    %c0_31 = arith.constant 0 : index
    %c0_32 = arith.constant 0 : index
    %28 = vector.load %arg2[%c0_31, %c0_32] : memref<9x45xf32, #tpu.memory_space<vmem>>, vector<9x45xf32>
    %c0_33 = arith.constant 0 : index
    %c0_34 = arith.constant 0 : index
    %29 = vector.load %arg12[%c0_33, %c0_34] : memref<81x288xf32, #tpu.memory_space<vmem>>, vector<45x288xf32>
    %cst = arith.constant dense<0.000000e+00> : vector<9x288xf32>
    %30 = tpu.matmul %28, %29, %cst {dimension_numbers = #tpu.dot_dimension_numbers<[1], [0], [0], [1], [0, 0, 1, 1], [], []>} : vector<9x45xf32>, vector<45x288xf32>, vector<9x288xf32> -> vector<9x288xf32>
    %31 = vector.extract_strided_slice %30 {offsets = [8, 0], sizes = [1, 288], strides = [1, 1]} : vector<9x288xf32> to vector<1x288xf32>
    %cst_35 = arith.constant 0.00999999977 : f32
    %32 = vector.broadcast %cst_35 : f32 to vector<1x288xf32>
    %33 = arith.cmpf oge, %31, %32 : vector<1x288xf32>
    %34 = arith.extui %33 : vector<1x288xi1> to vector<1x288xi32>
    %35 = arith.sitofp %34 : vector<1x288xi32> to vector<1x288xf32>
    %36 = arith.mulf %35, %0 : vector<1x288xf32>
    %37 = vector.extract_strided_slice %30 {offsets = [0, 0], sizes = [8, 288], strides = [1, 1]} : vector<9x288xf32> to vector<8x288xf32>
    %cst_36 = arith.constant 9.99999993E-9 : f32
    %38 = vector.broadcast %cst_36 : f32 to vector<1x288xf32>
    %39 = arith.addf %31, %38 : vector<1x288xf32>
    %40 = tpu.reciprocal %39 {approx = true} : vector<1x288xf32> -> vector<1x288xf32>
    %41 = vector.broadcast %40 : vector<1x288xf32> to vector<8x288xf32>
    %42 = arith.mulf %37, %41 : vector<8x288xf32>
    %c0_37 = arith.constant 0 : index
    %c0_38 = arith.constant 0 : index
    %43 = vector.load %arg3[%c0_37, %c0_38] : memref<8x1xf32, #tpu.memory_space<vmem>>, vector<8x1xf32>
    %44 = vector.broadcast %43 : vector<8x1xf32> to vector<8x288xf32>
    %45 = arith.addf %42, %44 : vector<8x288xf32>
    %46 = vector.broadcast %36 : vector<1x288xf32> to vector<8x288xf32>
    %47 = arith.mulf %45, %46 : vector<8x288xf32>
    %cst_39 = arith.constant 0.000000e+00 : f32
    %48 = vector.broadcast %cst_39 : f32 to vector<9x326xf32>
    %c0_40 = arith.constant 0 : index
    %c0_41 = arith.constant 0 : index
    %49 = vector.load %arg13[%c0_40, %c0_41] : memref<9x326xf32, #tpu.memory_space<vmem>>, vector<9x326xf32>
    tpu.vector_store %arg13[%c0_40, %c0_41], %48 {strides = array<i32>} : memref<9x326xf32, #tpu.memory_space<vmem>>, vector<9x326xf32>,
    %50 = vector.extract_strided_slice %47 {offsets = [0, 0], sizes = [4, 288], strides = [1, 1]} : vector<8x288xf32> to vector<4x288xf32>
    %cst_42 = arith.constant dense<0.000000e+00> : vector<4xf32>
    %51 = vector.multi_reduction <add>, %50, %cst_42 [1] : vector<4x288xf32> to vector<4xf32>
    %52 = vector.shape_cast %51 : vector<4xf32> to vector<4x1xf32>
    %cst_43 = arith.constant dense<0.000000e+00> : vector<1xf32>
    %53 = vector.multi_reduction <add>, %52, %cst_43 [0] : vector<4x1xf32> to vector<1xf32>
    %54 = vector.shape_cast %53 : vector<1xf32> to vector<1x1xf32>
    %55 = arith.mulf %50, %50 : vector<4x288xf32>
    %cst_44 = arith.constant dense<0.000000e+00> : vector<4xf32>
    %56 = vector.multi_reduction <add>, %55, %cst_44 [1] : vector<4x288xf32> to vector<4xf32>
    %57 = vector.shape_cast %56 : vector<4xf32> to vector<4x1xf32>
    %cst_45 = arith.constant dense<0.000000e+00> : vector<1xf32>
    %58 = vector.multi_reduction <add>, %57, %cst_45 [0] : vector<4x1xf32> to vector<1xf32>
    %59 = vector.shape_cast %58 : vector<1xf32> to vector<1x1xf32>
    %cst_46 = arith.constant 9.765625E-4 : f32
    %60 = vector.broadcast %cst_46 : f32 to vector<1x1xf32>
    %61 = arith.mulf %54, %60 : vector<1x1xf32>
    %cst_47 = arith.constant 9.765625E-4 : f32
    %62 = vector.broadcast %cst_47 : f32 to vector<1x1xf32>
    %63 = arith.mulf %59, %62 : vector<1x1xf32>
    %64 = arith.mulf %61, %61 : vector<1x1xf32>
    %65 = arith.subf %63, %64 : vector<1x1xf32>
    %cst_48 = arith.constant 0.000000e+00 : f32
    %66 = vector.broadcast %cst_48 : f32 to vector<1x1xf32>
    %67 = arith.maximumf %65, %66 : vector<1x1xf32>
    %cst_49 = arith.constant 9.99999974E-6 : f32
    %68 = vector.broadcast %cst_49 : f32 to vector<1x1xf32>
    %69 = arith.addf %67, %68 : vector<1x1xf32>
    %70 = math.rsqrt %69 : vector<1x1xf32>
    %71 = vector.broadcast %61 : vector<1x1xf32> to vector<4x288xf32>
    %72 = arith.subf %50, %71 : vector<4x288xf32>
    %73 = vector.broadcast %70 : vector<1x1xf32> to vector<4x288xf32>
    %74 = arith.mulf %72, %73 : vector<4x288xf32>
    %c0_50 = arith.constant 0 : index
    %c0_51 = arith.constant 0 : index
    %75 = vector.load %arg4[%c0_50, %c0_51] : memref<8x1xf32, #tpu.memory_space<vmem>>, vector<4x1xf32>
    %76 = vector.broadcast %75 : vector<4x1xf32> to vector<4x288xf32>
    %77 = arith.mulf %74, %76 : vector<4x288xf32>
    %c0_52 = arith.constant 0 : index
    %c0_53 = arith.constant 0 : index
    %78 = vector.load %arg5[%c0_52, %c0_53] : memref<8x1xf32, #tpu.memory_space<vmem>>, vector<4x1xf32>
    %79 = vector.broadcast %78 : vector<4x1xf32> to vector<4x288xf32>
    %80 = arith.addf %77, %79 : vector<4x288xf32>
    %cst_54 = arith.constant 0.000000e+00 : f32
    %81 = vector.broadcast %cst_54 : f32 to vector<4x288xf32>
    %82 = arith.maximumf %80, %81 : vector<4x288xf32>
    %83 = vector.broadcast %36 : vector<1x288xf32> to vector<4x288xf32>
    %84 = arith.mulf %82, %83 : vector<4x288xf32>
    %c0_55 = arith.constant 0 : index
    %c19_56 = arith.constant 19 : index
    %85 = vector.load %arg13[%c0_55, %c19_56] : memref<9x326xf32, #tpu.memory_space<vmem>>, vector<4x288xf32>
    tpu.vector_store %arg13[%c0_55, %c19_56], %84 {strides = array<i32>} : memref<9x326xf32, #tpu.memory_space<vmem>>, vector<4x288xf32>,
    %86 = vector.extract_strided_slice %47 {offsets = [4, 0], sizes = [4, 288], strides = [1, 1]} : vector<8x288xf32> to vector<4x288xf32>
    %cst_57 = arith.constant dense<0.000000e+00> : vector<4xf32>
    %87 = vector.multi_reduction <add>, %86, %cst_57 [1] : vector<4x288xf32> to vector<4xf32>
    %88 = vector.shape_cast %87 : vector<4xf32> to vector<4x1xf32>
    %cst_58 = arith.constant dense<0.000000e+00> : vector<1xf32>
    %89 = vector.multi_reduction <add>, %88, %cst_58 [0] : vector<4x1xf32> to vector<1xf32>
    %90 = vector.shape_cast %89 : vector<1xf32> to vector<1x1xf32>
    %91 = arith.mulf %86, %86 : vector<4x288xf32>
    %cst_59 = arith.constant dense<0.000000e+00> : vector<4xf32>
    %92 = vector.multi_reduction <add>, %91, %cst_59 [1] : vector<4x288xf32> to vector<4xf32>
    %93 = vector.shape_cast %92 : vector<4xf32> to vector<4x1xf32>
    %cst_60 = arith.constant dense<0.000000e+00> : vector<1xf32>
    %94 = vector.multi_reduction <add>, %93, %cst_60 [0] : vector<4x1xf32> to vector<1xf32>
    %95 = vector.shape_cast %94 : vector<1xf32> to vector<1x1xf32>
    %cst_61 = arith.constant 9.765625E-4 : f32
    %96 = vector.broadcast %cst_61 : f32 to vector<1x1xf32>
    %97 = arith.mulf %90, %96 : vector<1x1xf32>
    %cst_62 = arith.constant 9.765625E-4 : f32
    %98 = vector.broadcast %cst_62 : f32 to vector<1x1xf32>
    %99 = arith.mulf %95, %98 : vector<1x1xf32>
    %100 = arith.mulf %97, %97 : vector<1x1xf32>
    %101 = arith.subf %99, %100 : vector<1x1xf32>
    %cst_63 = arith.constant 0.000000e+00 : f32
    %102 = vector.broadcast %cst_63 : f32 to vector<1x1xf32>
    %103 = arith.maximumf %101, %102 : vector<1x1xf32>
    %cst_64 = arith.constant 9.99999974E-6 : f32
    %104 = vector.broadcast %cst_64 : f32 to vector<1x1xf32>
    %105 = arith.addf %103, %104 : vector<1x1xf32>
    %106 = math.rsqrt %105 : vector<1x1xf32>
    %107 = vector.broadcast %97 : vector<1x1xf32> to vector<4x288xf32>
    %108 = arith.subf %86, %107 : vector<4x288xf32>
    %109 = vector.broadcast %106 : vector<1x1xf32> to vector<4x288xf32>
    %110 = arith.mulf %108, %109 : vector<4x288xf32>
    %c4 = arith.constant 4 : index
    %c0_65 = arith.constant 0 : index
    %111 = vector.load %arg4[%c4, %c0_65] : memref<8x1xf32, #tpu.memory_space<vmem>>, vector<4x1xf32>
    %112 = vector.broadcast %111 : vector<4x1xf32> to vector<4x288xf32>
    %113 = arith.mulf %110, %112 : vector<4x288xf32>
    %c4_66 = arith.constant 4 : index
    %c0_67 = arith.constant 0 : index
    %114 = vector.load %arg5[%c4_66, %c0_67] : memref<8x1xf32, #tpu.memory_space<vmem>>, vector<4x1xf32>
    %115 = vector.broadcast %114 : vector<4x1xf32> to vector<4x288xf32>
    %116 = arith.addf %113, %115 : vector<4x288xf32>
    %cst_68 = arith.constant 0.000000e+00 : f32
    %117 = vector.broadcast %cst_68 : f32 to vector<4x288xf32>
    %118 = arith.maximumf %116, %117 : vector<4x288xf32>
    %119 = vector.broadcast %36 : vector<1x288xf32> to vector<4x288xf32>
    %120 = arith.mulf %118, %119 : vector<4x288xf32>
    %c4_69 = arith.constant 4 : index
    %c19_70 = arith.constant 19 : index
    %121 = vector.load %arg13[%c4_69, %c19_70] : memref<9x326xf32, #tpu.memory_space<vmem>>, vector<4x288xf32>
    tpu.vector_store %arg13[%c4_69, %c19_70], %120 {strides = array<i32>} : memref<9x326xf32, #tpu.memory_space<vmem>>, vector<4x288xf32>,
    %c8 = arith.constant 8 : index
    %c19_71 = arith.constant 19 : index
    %122 = vector.load %arg13[%c8, %c19_71] : memref<9x326xf32, #tpu.memory_space<vmem>>, vector<1x288xf32>
    tpu.vector_store %arg13[%c8, %c19_71], %36 {strides = array<i32>} : memref<9x326xf32, #tpu.memory_space<vmem>>, vector<1x288xf32>,
    %c0_72 = arith.constant 0 : index
    %c0_73 = arith.constant 0 : index
    %123 = vector.load %arg13[%c0_72, %c0_73] : memref<9x326xf32, #tpu.memory_space<vmem>>, vector<9x288xf32>
    %c0_74 = arith.constant 0 : index
    %c0_75 = arith.constant 0 : index
    %124 = vector.load %arg12[%c0_74, %c0_75] : memref<81x288xf32, #tpu.memory_space<vmem>>, vector<9x288xf32>
    tpu.vector_store %arg12[%c0_74, %c0_75], %123 {strides = array<i32>} : memref<81x288xf32, #tpu.memory_space<vmem>>, vector<9x288xf32>,
    %c0_76 = arith.constant 0 : index
    %c1_77 = arith.constant 1 : index
    %125 = vector.load %arg13[%c0_76, %c1_77] : memref<9x326xf32, #tpu.memory_space<vmem>>, vector<9x288xf32>
    %c9 = arith.constant 9 : index
    %c0_78 = arith.constant 0 : index
    %126 = vector.load %arg12[%c9, %c0_78] : memref<81x288xf32, #tpu.memory_space<vmem>>, vector<9x288xf32>
    tpu.vector_store %arg12[%c9, %c0_78], %125 {strides = array<i32>} : memref<81x288xf32, #tpu.memory_space<vmem>>, vector<9x288xf32>,
    %c0_79 = arith.constant 0 : index
    %c2_80 = arith.constant 2 : index
    %127 = vector.load %arg13[%c0_79, %c2_80] : memref<9x326xf32, #tpu.memory_space<vmem>>, vector<9x288xf32>
    %c18_81 = arith.constant 18 : index
    %c0_82 = arith.constant 0 : index
    %128 = vector.load %arg12[%c18_81, %c0_82] : memref<81x288xf32, #tpu.memory_space<vmem>>, vector<9x288xf32>
    tpu.vector_store %arg12[%c18_81, %c0_82], %127 {strides = array<i32>} : memref<81x288xf32, #tpu.memory_space<vmem>>, vector<9x288xf32>,
    %c0_83 = arith.constant 0 : index
    %c18_84 = arith.constant 18 : index
    %129 = vector.load %arg13[%c0_83, %c18_84] : memref<9x326xf32, #tpu.memory_space<vmem>>, vector<9x288xf32>
    %c27 = arith.constant 27 : index
    %c0_85 = arith.constant 0 : index
    %130 = vector.load %arg12[%c27, %c0_85] : memref<81x288xf32, #tpu.memory_space<vmem>>, vector<9x288xf32>
    tpu.vector_store %arg12[%c27, %c0_85], %129 {strides = array<i32>} : memref<81x288xf32, #tpu.memory_space<vmem>>, vector<9x288xf32>,
    %c0_86 = arith.constant 0 : index
    %c19_87 = arith.constant 19 : index
    %131 = vector.load %arg13[%c0_86, %c19_87] : memref<9x326xf32, #tpu.memory_space<vmem>>, vector<9x288xf32>
    %c36_88 = arith.constant 36 : index
    %c0_89 = arith.constant 0 : index
    %132 = vector.load %arg12[%c36_88, %c0_89] : memref<81x288xf32, #tpu.memory_space<vmem>>, vector<9x288xf32>
    tpu.vector_store %arg12[%c36_88, %c0_89], %131 {strides = array<i32>} : memref<81x288xf32, #tpu.memory_space<vmem>>, vector<9x288xf32>,
    %c0_90 = arith.constant 0 : index
    %c20_91 = arith.constant 20 : index
    %133 = vector.load %arg13[%c0_90, %c20_91] : memref<9x326xf32, #tpu.memory_space<vmem>>, vector<9x288xf32>
    %c45 = arith.constant 45 : index
    %c0_92 = arith.constant 0 : index
    %134 = vector.load %arg12[%c45, %c0_92] : memref<81x288xf32, #tpu.memory_space<vmem>>, vector<9x288xf32>
    tpu.vector_store %arg12[%c45, %c0_92], %133 {strides = array<i32>} : memref<81x288xf32, #tpu.memory_space<vmem>>, vector<9x288xf32>,
    %c0_93 = arith.constant 0 : index
    %c36_94 = arith.constant 36 : index
    %135 = vector.load %arg13[%c0_93, %c36_94] : memref<9x326xf32, #tpu.memory_space<vmem>>, vector<9x288xf32>
    %c54 = arith.constant 54 : index
    %c0_95 = arith.constant 0 : index
    %136 = vector.load %arg12[%c54, %c0_95] : memref<81x288xf32, #tpu.memory_space<vmem>>, vector<9x288xf32>
    tpu.vector_store %arg12[%c54, %c0_95], %135 {strides = array<i32>} : memref<81x288xf32, #tpu.memory_space<vmem>>, vector<9x288xf32>,
    %c0_96 = arith.constant 0 : index
    %c37_97 = arith.constant 37 : index
    %137 = vector.load %arg13[%c0_96, %c37_97] : memref<9x326xf32, #tpu.memory_space<vmem>>, vector<9x288xf32>
    %c63 = arith.constant 63 : index
    %c0_98 = arith.constant 0 : index
    %138 = vector.load %arg12[%c63, %c0_98] : memref<81x288xf32, #tpu.memory_space<vmem>>, vector<9x288xf32>
    tpu.vector_store %arg12[%c63, %c0_98], %137 {strides = array<i32>} : memref<81x288xf32, #tpu.memory_space<vmem>>, vector<9x288xf32>,
    %c0_99 = arith.constant 0 : index
    %c38_100 = arith.constant 38 : index
    %139 = vector.load %arg13[%c0_99, %c38_100] : memref<9x326xf32, #tpu.memory_space<vmem>>, vector<9x288xf32>
    %c72 = arith.constant 72 : index
    %c0_101 = arith.constant 0 : index
    %140 = vector.load %arg12[%c72, %c0_101] : memref<81x288xf32, #tpu.memory_space<vmem>>, vector<9x288xf32>
    tpu.vector_store %arg12[%c72, %c0_101], %139 {strides = array<i32>} : memref<81x288xf32, #tpu.memory_space<vmem>>, vector<9x288xf32>,
    %c0_102 = arith.constant 0 : index
    %c0_103 = arith.constant 0 : index
    %141 = vector.load %arg6[%c0_102, %c0_103] : memref<9x81xf32, #tpu.memory_space<vmem>>, vector<9x81xf32>
    %c0_104 = arith.constant 0 : index
    %c0_105 = arith.constant 0 : index
    %142 = vector.load %arg12[%c0_104, %c0_105] : memref<81x288xf32, #tpu.memory_space<vmem>>, vector<81x288xf32>
    %cst_106 = arith.constant dense<0.000000e+00> : vector<9x288xf32>
    %143 = tpu.matmul %141, %142, %cst_106 {dimension_numbers = #tpu.dot_dimension_numbers<[1], [0], [0], [1], [0, 0, 1, 1], [], []>} : vector<9x81xf32>, vector<81x288xf32>, vector<9x288xf32> -> vector<9x288xf32>
    %144 = vector.extract_strided_slice %143 {offsets = [8, 0], sizes = [1, 288], strides = [1, 1]} : vector<9x288xf32> to vector<1x288xf32>
    %cst_107 = arith.constant 0.00999999977 : f32
    %145 = vector.broadcast %cst_107 : f32 to vector<1x288xf32>
    %146 = arith.cmpf oge, %144, %145 : vector<1x288xf32>
    %147 = arith.extui %146 : vector<1x288xi1> to vector<1x288xi32>
    %148 = arith.sitofp %147 : vector<1x288xi32> to vector<1x288xf32>
    %149 = vector.extract_strided_slice %143 {offsets = [0, 0], sizes = [8, 288], strides = [1, 1]} : vector<9x288xf32> to vector<8x288xf32>
    %cst_108 = arith.constant 9.99999993E-9 : f32
    %150 = vector.broadcast %cst_108 : f32 to vector<1x288xf32>
    %151 = arith.addf %144, %150 : vector<1x288xf32>
    %152 = tpu.reciprocal %151 {approx = true} : vector<1x288xf32> -> vector<1x288xf32>
    %153 = vector.broadcast %152 : vector<1x288xf32> to vector<8x288xf32>
    %154 = arith.mulf %149, %153 : vector<8x288xf32>
    %c0_109 = arith.constant 0 : index
    %c0_110 = arith.constant 0 : index
    %155 = vector.load %arg7[%c0_109, %c0_110] : memref<8x1xf32, #tpu.memory_space<vmem>>, vector<8x1xf32>
    %156 = vector.broadcast %155 : vector<8x1xf32> to vector<8x288xf32>
    %157 = arith.addf %154, %156 : vector<8x288xf32>
    %158 = vector.broadcast %148 : vector<1x288xf32> to vector<8x288xf32>
    %159 = arith.mulf %157, %158 : vector<8x288xf32>
    %cst_111 = arith.constant 0.000000e+00 : f32
    %160 = vector.broadcast %cst_111 : f32 to vector<8x288xf32>
    %161 = arith.maximumf %159, %160 : vector<8x288xf32>
    %c0_112 = arith.constant 0 : index
    %c0_113 = arith.constant 0 : index
    %c0_114 = arith.constant 0 : index
    %162 = vector.load %arg10[%c0_112, %c0_113, %c0_114] : memref<1x9x288xf32, #tpu.memory_space<vmem>>, vector<1x8x288xf32>
    %163 = vector.shape_cast %162 : vector<1x8x288xf32> to vector<8x288xf32>
    %164 = vector.shape_cast %161 : vector<8x288xf32> to vector<1x8x288xf32>
    tpu.vector_store %arg10[%c0_112, %c0_113, %c0_114], %164 {strides = array<i32>} : memref<1x9x288xf32, #tpu.memory_space<vmem>>, vector<1x8x288xf32>,
    %c0_115 = arith.constant 0 : index
    %c8_116 = arith.constant 8 : index
    %c0_117 = arith.constant 0 : index
    %165 = vector.load %arg10[%c0_115, %c8_116, %c0_117] : memref<1x9x288xf32, #tpu.memory_space<vmem>>, vector<1x1x288xf32>
    %166 = vector.shape_cast %165 : vector<1x1x288xf32> to vector<1x288xf32>
    %167 = vector.shape_cast %148 : vector<1x288xf32> to vector<1x1x288xf32>
    tpu.vector_store %arg10[%c0_115, %c8_116, %c0_117], %167 {strides = array<i32>} : memref<1x9x288xf32, #tpu.memory_space<vmem>>, vector<1x1x288xf32>,
    %cst_118 = arith.constant 0.000000e+00 : f32
    %168 = vector.broadcast %cst_118 : f32 to vector<9x307xf32>
    %c0_119 = arith.constant 0 : index
    %c0_120 = arith.constant 0 : index
    %169 = vector.load %arg14[%c0_119, %c0_120] : memref<9x307xf32, #tpu.memory_space<vmem>>, vector<9x307xf32>
    tpu.vector_store %arg14[%c0_119, %c0_120], %168 {strides = array<i32>} : memref<9x307xf32, #tpu.memory_space<vmem>>, vector<9x307xf32>,
    %c0_121 = arith.constant 0 : index
    %c0_122 = arith.constant 0 : index
    %170 = vector.load %arg14[%c0_121, %c0_122] : memref<9x307xf32, #tpu.memory_space<vmem>>, vector<8x288xf32>
    tpu.vector_store %arg14[%c0_121, %c0_122], %161 {strides = array<i32>} : memref<9x307xf32, #tpu.memory_space<vmem>>, vector<8x288xf32>,
    %c8_123 = arith.constant 8 : index
    %c0_124 = arith.constant 0 : index
    %171 = vector.load %arg14[%c8_123, %c0_124] : memref<9x307xf32, #tpu.memory_space<vmem>>, vector<1x288xf32>
    tpu.vector_store %arg14[%c8_123, %c0_124], %148 {strides = array<i32>} : memref<9x307xf32, #tpu.memory_space<vmem>>, vector<1x288xf32>,
    %c0_125 = arith.constant 0 : index
    %c0_126 = arith.constant 0 : index
    %172 = vector.load %arg14[%c0_125, %c0_126] : memref<9x307xf32, #tpu.memory_space<vmem>>, vector<9x288xf32>
    %c0_127 = arith.constant 0 : index
    %c1_128 = arith.constant 1 : index
    %173 = vector.load %arg14[%c0_127, %c1_128] : memref<9x307xf32, #tpu.memory_space<vmem>>, vector<9x288xf32>
    %174 = arith.maximumf %172, %173 : vector<9x288xf32>
    %c0_129 = arith.constant 0 : index
    %c18_130 = arith.constant 18 : index
    %175 = vector.load %arg14[%c0_129, %c18_130] : memref<9x307xf32, #tpu.memory_space<vmem>>, vector<9x288xf32>
    %176 = arith.maximumf %174, %175 : vector<9x288xf32>
    %c0_131 = arith.constant 0 : index
    %c19_132 = arith.constant 19 : index
    %177 = vector.load %arg14[%c0_131, %c19_132] : memref<9x307xf32, #tpu.memory_space<vmem>>, vector<9x288xf32>
    %178 = arith.maximumf %176, %177 : vector<9x288xf32>
    %c0_133 = arith.constant 0 : index
    %c0_134 = arith.constant 0 : index
    %179 = vector.load %arg9[%c0_133, %c0_134] : memref<288x64xf32, #tpu.memory_space<vmem>>, vector<288x64xf32>
    %cst_135 = arith.constant dense<0.000000e+00> : vector<9x64xf32>
    %180 = tpu.matmul %178, %179, %cst_135 {dimension_numbers = #tpu.dot_dimension_numbers<[1], [0], [0], [1], [0, 0, 1, 1], [], []>} : vector<9x288xf32>, vector<288x64xf32>, vector<9x64xf32> -> vector<9x64xf32>
    %c0_136 = arith.constant 0 : index
    %c0_137 = arith.constant 0 : index
    %c0_138 = arith.constant 0 : index
    %181 = vector.load %arg11[%c0_136, %c0_137, %c0_138] : memref<1x9x64xf32, #tpu.memory_space<vmem>>, vector<1x9x64xf32>
    %182 = vector.shape_cast %181 : vector<1x9x64xf32> to vector<9x64xf32>
    %183 = vector.shape_cast %180 : vector<9x64xf32> to vector<1x9x64xf32>
    tpu.vector_store %arg11[%c0_136, %c0_137, %c0_138], %183 {strides = array<i32>} : memref<1x9x64xf32, #tpu.memory_space<vmem>>, vector<1x9x64xf32>,
    return
  }
  func.func @transform_0(%arg0: i32) -> (i32, i32, i32) {
    %c0_i32 = arith.constant 0 : i32
    %c0_i32_0 = arith.constant 0 : i32
    %c0_i32_1 = arith.constant 0 : i32
    return %arg0, %c0_i32, %c0_i32_0 : i32, i32, i32
  }
  func.func @transform_1(%arg0: i32) -> (i32, i32) {
    %c0_i32 = arith.constant 0 : i32
    %c0_i32_0 = arith.constant 0 : i32
    %c0_i32_1 = arith.constant 0 : i32
    return %c0_i32, %c0_i32_0 : i32, i32
  }
  func.func @transform_2(%arg0: i32) -> (i32, i32) {
    %c0_i32 = arith.constant 0 : i32
    %c0_i32_0 = arith.constant 0 : i32
    %c0_i32_1 = arith.constant 0 : i32
    return %c0_i32, %c0_i32_0 : i32, i32
  }
  func.func @transform_3(%arg0: i32) -> (i32, i32) {
    %c0_i32 = arith.constant 0 : i32
    %c0_i32_0 = arith.constant 0 : i32
    %c0_i32_1 = arith.constant 0 : i32
    return %c0_i32, %c0_i32_0 : i32, i32
  }
  func.func @transform_4(%arg0: i32) -> (i32, i32) {
    %c0_i32 = arith.constant 0 : i32
    %c0_i32_0 = arith.constant 0 : i32
    %c0_i32_1 = arith.constant 0 : i32
    return %c0_i32, %c0_i32_0 : i32, i32
  }
  func.func @transform_5(%arg0: i32) -> (i32, i32) {
    %c0_i32 = arith.constant 0 : i32
    %c0_i32_0 = arith.constant 0 : i32
    %c0_i32_1 = arith.constant 0 : i32
    return %c0_i32, %c0_i32_0 : i32, i32
  }
  func.func @transform_6(%arg0: i32) -> (i32, i32) {
    %c0_i32 = arith.constant 0 : i32
    %c0_i32_0 = arith.constant 0 : i32
    %c0_i32_1 = arith.constant 0 : i32
    return %c0_i32, %c0_i32_0 : i32, i32
  }
  func.func @transform_7(%arg0: i32) -> (i32, i32) {
    %c0_i32 = arith.constant 0 : i32
    %c0_i32_0 = arith.constant 0 : i32
    %c0_i32_1 = arith.constant 0 : i32
    return %c0_i32, %c0_i32_0 : i32, i32
  }
  func.func @transform_8(%arg0: i32) -> (i32, i32) {
    %c0_i32 = arith.constant 0 : i32
    %c0_i32_0 = arith.constant 0 : i32
    %c0_i32_1 = arith.constant 0 : i32
    return %c0_i32, %c0_i32_0 : i32, i32
  }
  func.func @transform_9(%arg0: i32) -> (i32, i32, i32) {
    %c0_i32 = arith.constant 0 : i32
    %c0_i32_0 = arith.constant 0 : i32
    %c0_i32_1 = arith.constant 0 : i32
    return %arg0, %c0_i32, %c0_i32_0 : i32, i32, i32
  }
  func.func @transform_10(%arg0: i32) -> (i32, i32, i32) {
    %c0_i32 = arith.constant 0 : i32
    %c0_i32_0 = arith.constant 0 : i32
    %c0_i32_1 = arith.constant 0 : i32
    return %arg0, %c0_i32, %c0_i32_0 : i32, i32, i32
  }
}

</mosaic_0001>

<llo_original>
// kernel: _lambda_.1
$region0: #{_lambda_.1}
  #allocation0 [shape = 'u32[]', space=smem, size = 0x4, offset = 0x4, fixed_abs, tag = 'smem constant byte address 0x4 - core index']
  #allocation1 [shape = 'u32[144,128]{1,0:T(1,128)}', space=vmem, size = 0x12000, scoped, tag = 'internal scratch']
  #allocation2 [shape = 'f32[81,288]{1,0:T(8,128)}', space=vmem, size = 0x21000, scoped, tag = 'scratch operand']
  #allocation3 [shape = 'f32[9,326]{1,0:T(8,128)}', space=vmem, size = 0x6000, scoped, tag = 'scratch operand']
  #allocation4 [shape = 'f32[9,307]{1,0:T(8,128)}', space=vmem, size = 0x6000, scoped, tag = 'scratch operand']
  %s0 = inlined_call_operand.vmem [shape: f32[2,5,326], index: 0, kind: input, shape index: {}]
  %s1 = inlined_call_operand.vmem [shape: f32[9,45], index: 1, kind: input, shape index: {}]
  %s2 = inlined_call_operand.vmem [shape: f32[8,1], index: 2, kind: input, shape index: {}]
  %s3 = inlined_call_operand.vmem [shape: f32[8,1], index: 3, kind: input, shape index: {}]
  %s4 = inlined_call_operand.vmem [shape: f32[8,1], index: 4, kind: input, shape index: {}]
  %s5 = inlined_call_operand.vmem [shape: f32[9,81], index: 5, kind: input, shape index: {}]
  %s6 = inlined_call_operand.vmem [shape: f32[8,1], index: 6, kind: input, shape index: {}]
  %s7 = inlined_call_operand.vmem [shape: f32[1,288], index: 7, kind: input, shape index: {}]
  %s8 = inlined_call_operand.vmem [shape: f32[288,64], index: 8, kind: input, shape index: {}]
  %s9 = inlined_call_operand.vmem [shape: f32[2,9,288], index: 9, kind: output, shape index: {0}]
  %s10 = inlined_call_operand.vmem [shape: f32[2,9,64], index: 10, kind: output, shape index: {1}]
  %11 = xla_tuple %s9, %s10
  %s12 = sld [smem:[#allocation0]]
  $region77: #{_lambda_.1} parent=0
    _
  %s14 = ssub.s32 1, %s12
  %s15 = scalar_select 0, %s14, %s12
  loop: start=0, step=1, limit=4
  $region2: #{_lambda_.1} parent=0 // loop_pre_header
    _
  $region3: #{_lambda_.1} parent=0 // loop_header
    %s17 = sphi 0, %s21
    %p18 = scmp.ge.s32.totalorder %s17, 4
    %s27 = sphi 0, %s29
    %s30 = sphi 0, %s27
    %s31 = sphi 0, %s30
    %s47 = sphi 0, %s31
    %s51 = sphi 0, %s51
    %s53 = sphi 0, %s51
    %s54 = sphi 0, %s53
    %s68 = sphi 0, %s54
    %s72 = sphi 0, %s72
    %s74 = sphi 0, %s72
    %s75 = sphi 0, %s74
    %s89 = sphi 0, %s75
    %s93 = sphi 0, %s93
    %s95 = sphi 0, %s93
    %s96 = sphi 0, %s95
    %s110 = sphi 0, %s96
    %s114 = sphi 0, %s114
    %s116 = sphi 0, %s114
    %s117 = sphi 0, %s116
    %s131 = sphi 0, %s117
    %s135 = sphi 0, %s135
    %s137 = sphi 0, %s135
    %s138 = sphi 0, %s137
    %s152 = sphi 0, %s138
    %s156 = sphi 0, %s156
    %s158 = sphi 0, %s156
    %s159 = sphi 0, %s158
    %s173 = sphi 0, %s159
    %s177 = sphi 0, %s177
    %s179 = sphi 0, %s177
    %s180 = sphi 0, %s179
    %s194 = sphi 0, %s180
    %s198 = sphi 0, %s198
    %s200 = sphi 0, %s198
    %s201 = sphi 0, %s200
    %s215 = sphi 0, %s201
    %s221 = sphi 0, %s223
    %s224 = sphi 0, %s221
    %s225 = sphi 0, %s224
    %s241 = sphi 0, %s225
    %s247 = sphi 0, %s249
    %s250 = sphi 0, %s247
    %s251 = sphi 0, %s250
    %s267 = sphi 0, %s251
  $region4: #{_lambda_.1} parent=0 // loop_header_branch
    %20 = sbr.rel (%p18) target = $region8
  $region5: #{_lambda_.1} parent=0 // loop_body
    %s22 = ssub.s32 %s17, 1
    %s23 = ssub.s32 %s17, 2
    %s24 = sadd.s32 %s17, 1
    %s25 = ssub.s32 %s17, %s24
    %p26 = scmp.eq.s32.totalorder %s25, 0
    %s28 = sadd.s32 %s27, 1
    %s29 = scalar_select %p26, %s27, %s28
    %p32 = pneg %p26
    %p33 = scmp.eq.s32.totalorder %s17, 1
    %p34 = por %p32, %p33
    %p35 = scmp.ne.s32.totalorder %s27, %s30
    %p36 = scmp.eq.s32.totalorder %s17, 0
    %p37 = por %p35, %p36
    %p38 = scmp.ne.s32.totalorder %s27, %s30
    %p39 = scmp.eq.s32.totalorder %s22, 1
    %p40 = por %p38, %p39
    %p41 = scmp.ne.s32.totalorder %s30, %s31
    %p42 = scmp.eq.s32.totalorder %s22, 0
    %p43 = por %p41, %p42
    %p44 = scmp.ne.s32.totalorder %s30, %s31
    %p45 = scmp.eq.s32.totalorder %s23, 1
    %p46 = por %p44, %p45
    %p48 = scmp.ne.s32.totalorder %s31, %s47
    %p49 = scmp.eq.s32.totalorder %s23, 0
    %p50 = por %p48, %p49
    %s52 = sadd.s32 %s51, 1
    %p55 = scmp.eq.s32.totalorder %s17, 1
    %p56 = scmp.ne.s32.totalorder %s51, %s53
    %p57 = scmp.eq.s32.totalorder %s17, 0
    %p58 = por %p56, %p57
    %p59 = scmp.ne.s32.totalorder %s51, %s53
    %p60 = scmp.eq.s32.totalorder %s22, 1
    %p61 = por %p59, %p60
    %p62 = scmp.ne.s32.totalorder %s53, %s54
    %p63 = scmp.eq.s32.totalorder %s22, 0
    %p64 = por %p62, %p63
    %p65 = scmp.ne.s32.totalorder %s53, %s54
    %p66 = scmp.eq.s32.totalorder %s23, 1
    %p67 = por %p65, %p66
    %p69 = scmp.ne.s32.totalorder %s54, %s68
    %p70 = scmp.eq.s32.totalorder %s23, 0
    %p71 = por %p69, %p70
    %s73 = sadd.s32 %s72, 1
    %p76 = scmp.eq.s32.totalorder %s17, 1
    %p77 = scmp.ne.s32.totalorder %s72, %s74
    %p78 = scmp.eq.s32.totalorder %s17, 0
    %p79 = por %p77, %p78
    %p80 = scmp.ne.s32.totalorder %s72, %s74
    %p81 = scmp.eq.s32.totalorder %s22, 1
    %p82 = por %p80, %p81
    %p83 = scmp.ne.s32.totalorder %s74, %s75
    %p84 = scmp.eq.s32.totalorder %s22, 0
    %p85 = por %p83, %p84
    %p86 = scmp.ne.s32.totalorder %s74, %s75
    %p87 = scmp.eq.s32.totalorder %s23, 1
    %p88 = por %p86, %p87
    %p90 = scmp.ne.s32.totalorder %s75, %s89
    %p91 = scmp.eq.s32.totalorder %s23, 0
    %p92 = por %p90, %p91
    %s94 = sadd.s32 %s93, 1
    %p97 = scmp.eq.s32.totalorder %s17, 1
    %p98 = scmp.ne.s32.totalorder %s93, %s95
    %p99 = scmp.eq.s32.totalorder %s17, 0
    %p100 = por %p98, %p99
    %p101 = scmp.ne.s32.totalorder %s93, %s95
    %p102 = scmp.eq.s32.totalorder %s22, 1
    %p103 = por %p101, %p102
    %p104 = scmp.ne.s32.totalorder %s95, %s96
    %p105 = scmp.eq.s32.totalorder %s22, 0
    %p106 = por %p104, %p105
    %p107 = scmp.ne.s32.totalorder %s95, %s96
    %p108 = scmp.eq.s32.totalorder %s23, 1
    %p109 = por %p107, %p108
    %p111 = scmp.ne.s32.totalorder %s96, %s110
    %p112 = scmp.eq.s32.totalorder %s23, 0
    %p113 = por %p111, %p112
    %s115 = sadd.s32 %s114, 1
    %p118 = scmp.eq.s32.totalorder %s17, 1
    %p119 = scmp.ne.s32.totalorder %s114, %s116
    %p120 = scmp.eq.s32.totalorder %s17, 0
    %p121 = por %p119, %p120
    %p122 = scmp.ne.s32.totalorder %s114, %s116
    %p123 = scmp.eq.s32.totalorder %s22, 1
    %p124 = por %p122, %p123
    %p125 = scmp.ne.s32.totalorder %s116, %s117
    %p126 = scmp.eq.s32.totalorder %s22, 0
    %p127 = por %p125, %p126
    %p128 = scmp.ne.s32.totalorder %s116, %s117
    %p129 = scmp.eq.s32.totalorder %s23, 1
    %p130 = por %p128, %p129
    %p132 = scmp.ne.s32.totalorder %s117, %s131
    %p133 = scmp.eq.s32.totalorder %s23, 0
    %p134 = por %p132, %p133
    %s136 = sadd.s32 %s135, 1
    %p139 = scmp.eq.s32.totalorder %s17, 1
    %p140 = scmp.ne.s32.totalorder %s135, %s137
    %p141 = scmp.eq.s32.totalorder %s17, 0
    %p142 = por %p140, %p141
    %p143 = scmp.ne.s32.totalorder %s135, %s137
    %p144 = scmp.eq.s32.totalorder %s22, 1
    %p145 = por %p143, %p144
    %p146 = scmp.ne.s32.totalorder %s137, %s138
    %p147 = scmp.eq.s32.totalorder %s22, 0
    %p148 = por %p146, %p147
    %p149 = scmp.ne.s32.totalorder %s137, %s138
    %p150 = scmp.eq.s32.totalorder %s23, 1
    %p151 = por %p149, %p150
    %p153 = scmp.ne.s32.totalorder %s138, %s152
    %p154 = scmp.eq.s32.totalorder %s23, 0
    %p155 = por %p153, %p154
    %s157 = sadd.s32 %s156, 1
    %p160 = scmp.eq.s32.totalorder %s17, 1
    %p161 = scmp.ne.s32.totalorder %s156, %s158
    %p162 = scmp.eq.s32.totalorder %s17, 0
    %p163 = por %p161, %p162
    %p164 = scmp.ne.s32.totalorder %s156, %s158
    %p165 = scmp.eq.s32.totalorder %s22, 1
    %p166 = por %p164, %p165
    %p167 = scmp.ne.s32.totalorder %s158, %s159
    %p168 = scmp.eq.s32.totalorder %s22, 0
    %p169 = por %p167, %p168
    %p170 = scmp.ne.s32.totalorder %s158, %s159
    %p171 = scmp.eq.s32.totalorder %s23, 1
    %p172 = por %p170, %p171
    %p174 = scmp.ne.s32.totalorder %s159, %s173
    %p175 = scmp.eq.s32.totalorder %s23, 0
    %p176 = por %p174, %p175
    %s178 = sadd.s32 %s177, 1
    %p181 = scmp.eq.s32.totalorder %s17, 1
    %p182 = scmp.ne.s32.totalorder %s177, %s179
    %p183 = scmp.eq.s32.totalorder %s17, 0
    %p184 = por %p182, %p183
    %p185 = scmp.ne.s32.totalorder %s177, %s179
    %p186 = scmp.eq.s32.totalorder %s22, 1
    %p187 = por %p185, %p186
    %p188 = scmp.ne.s32.totalorder %s179, %s180
    %p189 = scmp.eq.s32.totalorder %s22, 0
    %p190 = por %p188, %p189
    %p191 = scmp.ne.s32.totalorder %s179, %s180
    %p192 = scmp.eq.s32.totalorder %s23, 1
    %p193 = por %p191, %p192
    %p195 = scmp.ne.s32.totalorder %s180, %s194
    %p196 = scmp.eq.s32.totalorder %s23, 0
    %p197 = por %p195, %p196
    %s199 = sadd.s32 %s198, 1
    %p202 = scmp.eq.s32.totalorder %s17, 1
    %p203 = scmp.ne.s32.totalorder %s198, %s200
    %p204 = scmp.eq.s32.totalorder %s17, 0
    %p205 = por %p203, %p204
    %p206 = scmp.ne.s32.totalorder %s198, %s200
    %p207 = scmp.eq.s32.totalorder %s22, 1
    %p208 = por %p206, %p207
    %p209 = scmp.ne.s32.totalorder %s200, %s201
    %p210 = scmp.eq.s32.totalorder %s22, 0
    %p211 = por %p209, %p210
    %p212 = scmp.ne.s32.totalorder %s200, %s201
    %p213 = scmp.eq.s32.totalorder %s23, 1
    %p214 = por %p212, %p213
    %p216 = scmp.ne.s32.totalorder %s201, %s215
    %p217 = scmp.eq.s32.totalorder %s23, 0
    %p218 = por %p216, %p217
    %s219 = ssub.s32 %s17, %s24
    %p220 = scmp.eq.s32.totalorder %s219, 0
    %s222 = sadd.s32 %s221, 1
    %s223 = scalar_select %p220, %s221, %s222
    %p226 = pneg %p220
    %p227 = scmp.eq.s32.totalorder %s17, 1
    %p228 = por %p226, %p227
    %p229 = scmp.ne.s32.totalorder %s221, %s224
    %p230 = scmp.eq.s32.totalorder %s17, 0
    %p231 = por %p229, %p230
    %p232 = scmp.ne.s32.totalorder %s221, %s224
    %p233 = scmp.eq.s32.totalorder %s22, 1
    %p234 = por %p232, %p233
    %p235 = scmp.ne.s32.totalorder %s224, %s225
    %p236 = scmp.eq.s32.totalorder %s22, 0
    %p237 = por %p235, %p236
    %p238 = scmp.ne.s32.totalorder %s224, %s225
    %p239 = scmp.eq.s32.totalorder %s23, 1
    %p240 = por %p238, %p239
    %p242 = scmp.ne.s32.totalorder %s225, %s241
    %p243 = scmp.eq.s32.totalorder %s23, 0
    %p244 = por %p242, %p243
    %s245 = ssub.s32 %s17, %s24
    %p246 = scmp.eq.s32.totalorder %s245, 0
    %s248 = sadd.s32 %s247, 1
    %s249 = scalar_select %p246, %s247, %s248
    %p252 = pneg %p246
    %p253 = scmp.eq.s32.totalorder %s17, 1
    %p254 = por %p252, %p253
    %p255 = scmp.ne.s32.totalorder %s247, %s250
    %p256 = scmp.eq.s32.totalorder %s17, 0
    %p257 = por %p255, %p256
    %p258 = scmp.ne.s32.totalorder %s247, %s250
    %p259 = scmp.eq.s32.totalorder %s22, 1
    %p260 = por %p258, %p259
    %p261 = scmp.ne.s32.totalorder %s250, %s251
    %p262 = scmp.eq.s32.totalorder %s22, 0
    %p263 = por %p261, %p262
    %p264 = scmp.ne.s32.totalorder %s250, %s251
    %p265 = scmp.eq.s32.totalorder %s23, 1
    %p266 = por %p264, %p265
    %p268 = scmp.ne.s32.totalorder %s251, %s267
    %p269 = scmp.eq.s32.totalorder %s23, 0
    %p270 = por %p268, %p269
    %p271 = scmp.le.s32.totalorder 1, %s17
    %p272 = scmp.lt.s32.totalorder %s17, 3
    %p273 = pnand %p271, %p272
    %p274 = pneg %p273
    // Predicated region
    $region9: #{_lambda_.1} parent=5 // pred_check
      _
    $region10: #{_lambda_.1} parent=5 // pred_check_branch
      %276 = sbr.rel (%p273) target = $region12
    $region11: #{_lambda_.1} parent=5 // pred_region
      %s277 = ssub.s32 %s17, 1
      // Predicated region
      $region13: #{_lambda_.1} parent=11 // pred_check
        %p278 = pneg %p64
      $region14: #{_lambda_.1} parent=11 // pred_check_branch
        %280 = sbr.rel (%p278) target = $region16
      $region15: #{_lambda_.1} parent=11 // pred_region
        _
      $region16: #{_lambda_.1} parent=11 // pred_fallthru
        _
      // Predicated region
      $region17: #{_lambda_.1} parent=11 // pred_check
        %p281 = pneg %p85
      $region18: #{_lambda_.1} parent=11 // pred_check_branch
        %283 = sbr.rel (%p281) target = $region20
      $region19: #{_lambda_.1} parent=11 // pred_region
        _
      $region20: #{_lambda_.1} parent=11 // pred_fallthru
        _
      // Predicated region
      $region21: #{_lambda_.1} parent=11 // pred_check
        %p284 = pneg %p106
      $region22: #{_lambda_.1} parent=11 // pred_check_branch
        %286 = sbr.rel (%p284) target = $region24
      $region23: #{_lambda_.1} parent=11 // pred_region
        _
      $region24: #{_lambda_.1} parent=11 // pred_fallthru
        _
      // Predicated region
      $region25: #{_lambda_.1} parent=11 // pred_check
        %p287 = pneg %p127
      $region26: #{_lambda_.1} parent=11 // pred_check_branch
        %289 = sbr.rel (%p287) target = $region28
      $region27: #{_lambda_.1} parent=11 // pred_region
        _
      $region28: #{_lambda_.1} parent=11 // pred_fallthru
        _
      // Predicated region
      $region29: #{_lambda_.1} parent=11 // pred_check
        %p290 = pneg %p148
      $region30: #{_lambda_.1} parent=11 // pred_check_branch
        %292 = sbr.rel (%p290) target = $region32
      $region31: #{_lambda_.1} parent=11 // pred_region
        _
      $region32: #{_lambda_.1} parent=11 // pred_fallthru
        _
      // Predicated region
      $region33: #{_lambda_.1} parent=11 // pred_check
        %p293 = pneg %p169
      $region34: #{_lambda_.1} parent=11 // pred_check_branch
        %295 = sbr.rel (%p293) target = $region36
      $region35: #{_lambda_.1} parent=11 // pred_region
        _
      $region36: #{_lambda_.1} parent=11 // pred_fallthru
        _
      // Predicated region
      $region37: #{_lambda_.1} parent=11 // pred_check
        %p296 = pneg %p190
      $region38: #{_lambda_.1} parent=11 // pred_check_branch
        %298 = sbr.rel (%p296) target = $region40
      $region39: #{_lambda_.1} parent=11 // pred_region
        _
      $region40: #{_lambda_.1} parent=11 // pred_fallthru
        _
      // Predicated region
      $region41: #{_lambda_.1} parent=11 // pred_check
        %p299 = pneg %p211
      $region42: #{_lambda_.1} parent=11 // pred_check_branch
        %301 = sbr.rel (%p299) target = $region44
      $region43: #{_lambda_.1} parent=11 // pred_region
        _
      $region44: #{_lambda_.1} parent=11 // pred_fallthru
        _
    $region12: #{_lambda_.1} parent=5 // pred_fallthru
      _
    %p302 = scmp.lt.s32.totalorder %s17, 2
    // Predicated region
    $region45: #{_lambda_.1} parent=5 // pred_check
      %p303 = pneg %p302
    $region46: #{_lambda_.1} parent=5 // pred_check_branch
      %305 = sbr.rel (%p303) target = $region48
    $region47: #{_lambda_.1} parent=5 // pred_region
      // Predicated region
      $region49: #{_lambda_.1} parent=47 // pred_check
        %p306 = pneg %p37
      $region50: #{_lambda_.1} parent=47 // pred_check_branch
        %308 = sbr.rel (%p306) target = $region52
      $region51: #{_lambda_.1} parent=47 // pred_region
        %p309 = scmp.lt.s32.totalorder %s17, 1
        %s310 = scalar_select %p309, %s17, 1
        %s311 = smul.addr %s310, 3
        %s312 = smul.addr %s311, 8
        %s313 = scalar_lea.vmem %s0, %s312
      $region52: #{_lambda_.1} parent=47 // pred_fallthru
        _
    $region48: #{_lambda_.1} parent=5 // pred_fallthru
      _
    %p314 = scmp.le.s32.totalorder 1, %s17
    %p315 = scmp.lt.s32.totalorder %s17, 3
    %p316 = pnand %p314, %p315
    %p317 = pneg %p316
    // Predicated region
    $region53: #{_lambda_.1} parent=5 // pred_check
      _
    $region54: #{_lambda_.1} parent=5 // pred_check_branch
      %319 = sbr.rel (%p316) target = $region56
    $region55: #{_lambda_.1} parent=5 // pred_region
      %s320 = ssub.s32 %s17, 1
      %p321 = scmp.lt.s32.totalorder %s22, 1
      %s322 = scalar_select %p321, %s22, 1
      %s323 = smul.addr %s322, 3
      %s324 = smul.addr %s323, 8
      %s325 = scalar_lea.vmem %s0, %s324
      %p326 = pneg %p43
      %p327 = pneg %p40
      %p328 = pneg %p64
      %p329 = pneg %p61
      %p330 = pneg %p85
      %p331 = pneg %p82
      %p332 = pneg %p106
      %p333 = pneg %p103
      %p334 = pneg %p127
      %p335 = pneg %p124
      %p336 = pneg %p148
      %p337 = pneg %p145
      %p338 = pneg %p169
      %p339 = pneg %p166
      %p340 = pneg %p190
      %p341 = pneg %p187
      %p342 = pneg %p211
      %p343 = pneg %p208
      %p344 = pneg %p237
      %p345 = pneg %p234
      %p346 = scmp.lt.s32.totalorder %s22, 1
      %s347 = scalar_select %p346, %s22, 1
      %s348 = smul.addr %s347, 6
      %s349 = smul.addr %s348, 8
      %s350 = scalar_lea.vmem %s9, %s349
      %p351 = pneg %p263
      %p352 = pneg %p260
      %p353 = scmp.lt.s32.totalorder %s22, 1
      %s354 = scalar_select %p353, %s22, 1
      %s355 = smul.addr %s354, 2
      %s356 = smul.addr %s355, 8
      %s357 = scalar_lea.vmem %s10, %s356
      %p358 = scmp.lt.s32.totalorder %s22, 1
      %s359 = scalar_select %p358, %s22, 1
      %s360 = smul.addr %s359, 3
      %s361 = smul.addr %s360, 8
      %s362 = scalar_lea.vmem %s0, %s361
      %p363 = scmp.lt.s32.totalorder %s22, 1
      %s364 = scalar_select %p363, %s22, 1
      %s365 = smul.addr %s364, 6
      %s366 = smul.addr %s365, 8
      %s367 = scalar_lea.vmem %s9, %s366
      %p368 = scmp.lt.s32.totalorder %s22, 1
      %s369 = scalar_select %p368, %s22, 1
      %s370 = smul.addr %s369, 2
      %s371 = smul.addr %s370, 8
      %s372 = scalar_lea.vmem %s10, %s371
      %v373 = vld [vmem:[%s7] sm:$0x7]
      %v374 = vld [vmem:[%s362] sm:$0x1f]
      %v375 = vld [vmem:[%s362 + $0x8] sm:$0x1f]
      %v376 = vld [vmem:[%s362 + $0x10] sm:$0x1f]
      %377 = vst [vmem:[#allocation2] sm:$0x1f] %v374
      %378 = vst [vmem:[#allocation2 + $0x8] sm:$0x1f] %v375
      %vm379 = vcmask 258048
      %380 = vst.msk [vmem:[#allocation2 + $0x10] sm:$0x1f] %vm379, %v376
      %v381 = vld [vmem:[%s362] sm:$0x1f]
      %v382 = vld [vmem:[%s362 + $0x8] sm:$0x1f]
      %v383 = vld [vmem:[%s362 + $0x10] sm:$0x1f]
      %v387 = vrot.slane %v381, 3
      %v388 = vrot.slane %v382, 3
      %v389 = vrot.slane %v383, 3
      %390 = vrot.lane.b32.xlu0 %v387, 127
      %v391 = vpop.permute.xlu0 %390
      %392 = vrot.lane.b32.xlu0 %v388, 127
      %v393 = vpop.permute.xlu0 %392
      %394 = vrot.lane.b32.xlu0 %v389, 127
      %v395 = vpop.permute.xlu0 %394
      %vm396 = vcmask 1039360
      %v397 = vsel %vm396, %v391, %v393
      %v398 = vsel %vm396, %v393, %v395
      %402 = vst [vmem:[#allocation2] sm:$0xe0] %v397
      %403 = vst [vmem:[#allocation2 + $0x8] sm:$0xe0] %v398
      %vm404 = vcmask 261125
      %405 = vst.msk [vmem:[#allocation2 + $0x10] sm:$0xe0] %vm404, %v395
      %406 = vst [vmem:[#allocation2 + $0x18] sm:$0x3] %v397
      %407 = vst [vmem:[#allocation2 + $0x20] sm:$0x3] %v398
      %vm408 = vcmask 254976
      %409 = vst.msk [vmem:[#allocation2 + $0x28] sm:$0x3] %vm408, %v395
      %v410 = vld [vmem:[%s362] sm:$0x1f]
      %v411 = vld [vmem:[%s362 + $0x8] sm:$0x1f]
      %v412 = vld [vmem:[%s362 + $0x10] sm:$0x1f]
      %v416 = vrot.slane %v410, 6
      %v417 = vrot.slane %v411, 6
      %v418 = vrot.slane %v412, 6
      %419 = vrot.lane.b32.xlu0 %v416, 126
      %v420 = vpop.permute.xlu0 %419
      %421 = vrot.lane.b32.xlu0 %v417, 126
      %v422 = vpop.permute.xlu0 %421
      %423 = vrot.lane.b32.xlu0 %v418, 126
      %v424 = vpop.permute.xlu0 %423
      %vm425 = vcmask 1031168
      %v426 = vsel %vm425, %v420, %v422
      %v427 = vsel %vm425, %v422, %v424
      %431 = vst [vmem:[#allocation2 + $0x18] sm:$0x7c] %v426
      %432 = vst [vmem:[#allocation2 + $0x20] sm:$0x7c] %v427
      %vm433 = vcmask 260098
      %434 = vst.msk [vmem:[#allocation2 + $0x28] sm:$0x7c] %vm433, %v424
      %v435 = vld [vmem:[%s362] sm:$0x1f]
      %v436 = vld [vmem:[%s362 + $0x8] sm:$0x1f]
      %v437 = vld [vmem:[%s362 + $0x10] sm:$0x1f]
      %v441 = vrot.slane %v435, 1
      %v442 = vrot.slane %v436, 1
      %v443 = vrot.slane %v437, 1
      %444 = vrot.lane.b32.xlu0 %v441, 110
      %v445 = vpop.permute.xlu0 %444
      %446 = vrot.lane.b32.xlu0 %v442, 110
      %v447 = vpop.permute.xlu0 %446
      %448 = vrot.lane.b32.xlu0 %v443, 110
      %v449 = vpop.permute.xlu0 %448
      %vm450 = vcmask 900096
      %v451 = vsel %vm450, %v445, %v447
      %v452 = vsel %vm450, %v447, %v449
      %456 = vst [vmem:[#allocation2 + $0x18] sm:$0x80] %v451
      %457 = vst [vmem:[#allocation2 + $0x20] sm:$0x80] %v452
      %vm458 = vcmask 261127
      %459 = vst.msk [vmem:[#allocation2 + $0x28] sm:$0x80] %vm458, %v449
      %460 = vst [vmem:[#allocation2 + $0x30] sm:$0xf] %v451
      %461 = vst [vmem:[#allocation2 + $0x38] sm:$0xf] %v452
      %vm462 = vcmask 257024
      %463 = vst.msk [vmem:[#allocation2 + $0x40] sm:$0xf] %vm462, %v449
      %v464 = vld [vmem:[%s362] sm:$0x1f]
      %v465 = vld [vmem:[%s362 + $0x8] sm:$0x1f]
      %v466 = vld [vmem:[%s362 + $0x10] sm:$0x1f]
      %v470 = vrot.slane %v464, 4
      %v471 = vrot.slane %v465, 4
      %v472 = vrot.slane %v466, 4
      %473 = vrot.lane.b32.xlu0 %v470, 109
      %v474 = vpop.permute.xlu0 %473
      %475 = vrot.lane.b32.xlu0 %v471, 109
      %v476 = vpop.permute.xlu0 %475
      %477 = vrot.lane.b32.xlu0 %v472, 109
      %v478 = vpop.permute.xlu0 %477
      %vm479 = vcmask 891904
      %v480 = vsel %vm479, %v474, %v476
      %v481 = vsel %vm479, %v476, %v478
      %485 = vst [vmem:[#allocation2 + $0x30] sm:$0xf0] %v480
      %486 = vst [vmem:[#allocation2 + $0x38] sm:$0xf0] %v481
      %vm487 = vcmask 261124
      %488 = vst.msk [vmem:[#allocation2 + $0x40] sm:$0xf0] %vm487, %v478
      %489 = vst [vmem:[#allocation2 + $0x48] sm:$0x1] %v480
      %490 = vst [vmem:[#allocation2 + $0x50] sm:$0x1] %v481
      %vm491 = vcmask 253952
      %492 = vst.msk [vmem:[#allocation2 + $0x58] sm:$0x1] %vm491, %v478
      %v493 = vld [vmem:[%s362] sm:$0x1f]
      %v494 = vld [vmem:[%s362 + $0x8] sm:$0x1f]
      %v495 = vld [vmem:[%s362 + $0x10] sm:$0x1f]
      %v499 = vrot.slane %v493, 7
      %v500 = vrot.slane %v494, 7
      %v501 = vrot.slane %v495, 7
      %502 = vrot.lane.b32.xlu0 %v499, 108
      %v503 = vpop.permute.xlu0 %502
      %504 = vrot.lane.b32.xlu0 %v500, 108
      %v505 = vpop.permute.xlu0 %504
      %506 = vrot.lane.b32.xlu0 %v501, 108
      %v507 = vpop.permute.xlu0 %506
      %vm508 = vcmask 883712
      %v509 = vsel %vm508, %v503, %v505
      %v510 = vsel %vm508, %v505, %v507
      %514 = vst [vmem:[#allocation2 + $0x48] sm:$0x3e] %v509
      %515 = vst [vmem:[#allocation2 + $0x50] sm:$0x3e] %v510
      %vm516 = vcmask 259073
      %517 = vst.msk [vmem:[#allocation2 + $0x58] sm:$0x3e] %vm516, %v507
      %v518 = vld [vmem:[%s362] sm:$0x1f]
      %v519 = vld [vmem:[%s362 + $0x8] sm:$0x1f]
      %v520 = vld [vmem:[%s362 + $0x10] sm:$0x1f]
      %v524 = vrot.slane %v518, 2
      %v525 = vrot.slane %v519, 2
      %v526 = vrot.slane %v520, 2
      %527 = vrot.lane.b32.xlu0 %v524, 92
      %v528 = vpop.permute.xlu0 %527
      %529 = vrot.lane.b32.xlu0 %v525, 92
      %v530 = vpop.permute.xlu0 %529
      %531 = vrot.lane.b32.xlu0 %v526, 92
      %v532 = vpop.permute.xlu0 %531
      %vm533 = vcmask 752640
      %v534 = vsel %vm533, %v528, %v530
      %v535 = vsel %vm533, %v530, %v532
      %539 = vst [vmem:[#allocation2 + $0x48] sm:$0xc0] %v534
      %540 = vst [vmem:[#allocation2 + $0x50] sm:$0xc0] %v535
      %vm541 = vcmask 261126
      %542 = vst.msk [vmem:[#allocation2 + $0x58] sm:$0xc0] %vm541, %v532
      %543 = vst [vmem:[#allocation2 + $0x60] sm:$0x7] %v534
      %544 = vst [vmem:[#allocation2 + $0x68] sm:$0x7] %v535
      %vm545 = vcmask 256000
      %546 = vst.msk [vmem:[#allocation2 + $0x70] sm:$0x7] %vm545, %v532
      %v547 = vld [vmem:[%s362] sm:$0x1f]
      %v548 = vld [vmem:[%s362 + $0x8] sm:$0x1f]
      %v549 = vld [vmem:[%s362 + $0x10] sm:$0x1f]
      %v553 = vrot.slane %v547, 5
      %v554 = vrot.slane %v548, 5
      %v555 = vrot.slane %v549, 5
      %556 = vrot.lane.b32.xlu0 %v553, 91
      %v557 = vpop.permute.xlu0 %556
      %558 = vrot.lane.b32.xlu0 %v554, 91
      %v559 = vpop.permute.xlu0 %558
      %560 = vrot.lane.b32.xlu0 %v555, 91
      %v561 = vpop.permute.xlu0 %560
      %vm562 = vcmask 744448
      %v563 = vsel %vm562, %v557, %v559
      %v564 = vsel %vm562, %v559, %v561
      %568 = vst [vmem:[#allocation2 + $0x60] sm:$0xf8] %v563
      %569 = vst [vmem:[#allocation2 + $0x68] sm:$0xf8] %v564
      %vm570 = vcmask 261123
      %571 = vst.msk [vmem:[#allocation2 + $0x70] sm:$0xf8] %vm570, %v561
      %v572 = vld [vmem:[%s362] sm:$0x1f]
      %v573 = vld [vmem:[%s362 + $0x8] sm:$0x1f]
      %v574 = vld [vmem:[%s362 + $0x10] sm:$0x1f]
      %578 = vrot.lane.b32.xlu0 %v572, 90
      %v579 = vpop.permute.xlu0 %578
      %580 = vrot.lane.b32.xlu0 %v573, 90
      %v581 = vpop.permute.xlu0 %580
      %582 = vrot.lane.b32.xlu0 %v574, 90
      %v583 = vpop.permute.xlu0 %582
      %vm584 = vcmask 736256
      %v585 = vsel %vm584, %v579, %v581
      %v586 = vsel %vm584, %v581, %v583
      %590 = vst [vmem:[#allocation2 + $0x78] sm:$0x1f] %v585
      %591 = vst [vmem:[#allocation2 + $0x80] sm:$0x1f] %v586
      %592 = vst.msk [vmem:[#allocation2 + $0x88] sm:$0x1f] %vm379, %v583
      %v593 = vld [vmem:[%s1] sm:$0xff]
      %v594 = vld [vmem:[%s1 + $0x8] sm:$0x1]
      %v595 = vld [vmem:[#allocation2] sm:$0xff]
      %v596 = vld [vmem:[#allocation2 + $0x8] sm:$0xff]
      %v597 = vld [vmem:[#allocation2 + $0x10] sm:$0xff]
      %v598 = vld [vmem:[#allocation2 + $0x18] sm:$0xff]
      %v599 = vld [vmem:[#allocation2 + $0x20] sm:$0xff]
      %v600 = vld [vmem:[#allocation2 + $0x28] sm:$0xff]
      %v601 = vld [vmem:[#allocation2 + $0x30] sm:$0xff]
      %v602 = vld [vmem:[#allocation2 + $0x38] sm:$0xff]
      %v603 = vld [vmem:[#allocation2 + $0x40] sm:$0xff]
      %v604 = vld [vmem:[#allocation2 + $0x48] sm:$0xff]
      %v605 = vld [vmem:[#allocation2 + $0x50] sm:$0xff]
      %v606 = vld [vmem:[#allocation2 + $0x58] sm:$0xff]
      %v607 = vld [vmem:[#allocation2 + $0x60] sm:$0xff]
      %v608 = vld [vmem:[#allocation2 + $0x68] sm:$0xff]
      %v609 = vld [vmem:[#allocation2 + $0x70] sm:$0xff]
      %v610 = vld [vmem:[#allocation2 + $0x78] sm:$0x1f]
      %v611 = vld [vmem:[#allocation2 + $0x80] sm:$0x1f]
      %v612 = vld [vmem:[#allocation2 + $0x88] sm:$0x1f]
      %vm613 = vcmask 367616
      %v615 = vsel %vm613, %v593, 0
      %v618 = vsel %vm613, %v594, 0
      %vm620 = vcmask 1044480
      %v622 = vsel %vm620, %v610, 0
      %v625 = vsel %vm620, %v611, 0
      %v628 = vsel %vm620, %v612, 0
      %630 = vmatprep.subr.mxu0 %v596
      %631 = vmatpush1.msra.mxu0 %v595
      %632 = vmatprep.subr.mxu0 %v599
      %633 = vmatpush1.msra.mxu0 %v598
      %634 = vmatprep.subr.mxu0 %v602
      %635 = vmatpush1.msra.mxu0 %v601
      %636 = vmatprep.subr.mxu0 %v605
      %637 = vmatpush1.msra.mxu0 %v604
      %638 = vmatprep.subr.mxu0 %v608
      %639 = vmatpush1.msra.mxu0 %v607
      %640 = vmatprep.subr.mxu0 %v625
      %641 = vmatpush1.msra.mxu0 %v622
      %642 = vmatprep.subr.mxu0 0.0
      %643 = vmatpush1.msra.mxu0 0.0
      %644 = vmatprep.subr.mxu0 0.0
      %645 = vmatpush1.msra.mxu0 0.0
      %646 = vmatprep.subr.mxu0 0.0
      %647 = vmatpush1.msra.mxu0 0.0
      %648 = vmatprep.subr.mxu0 0.0
      %649 = vmatpush1.msra.mxu0 0.0
      %650 = vmatprep.subr.mxu0 0.0
      %651 = vmatpush1.msra.mxu0 0.0
      %652 = vmatprep.subr.mxu0 0.0
      %653 = vmatpush1.msra.mxu0 0.0
      %654 = vmatprep.subr.mxu0 0.0
      %655 = vmatpush1.msra.mxu0 0.0
      %656 = vmatprep.subr.mxu0 0.0
      %657 = vmatpush1.msra.mxu0 0.0
      %658 = vmatprep.subr.mxu0 0.0
      %659 = vmatpush1.msra.mxu0 0.0
      %660 = vmatprep.subr.mxu0 0.0
      %661 = vmatpush1.msra.mxu0 0.0
      %662 = vmatprep.subr.mxu0 0.0
      %663 = vmatpush1.msra.mxu0 0.0
      %664 = vmatprep.subr.mxu0 0.0
      %665 = vmatpush1.msra.mxu0 0.0
      %666 = vmatprep.subr.mxu0 0.0
      %667 = vmatpush1.msra.mxu0 0.0
      %668 = vmatprep.subr.mxu0 0.0
      %669 = vmatpush1.msra.mxu0 0.0
      %670 = vmatprep.subr.mxu0 0.0
      %671 = vmatpush1.msra.mxu0 0.0
      %672 = vmatprep.subr.mxu0 0.0
      %673 = vmatpush1.msra.mxu0 0.0
      %674 = vmatprep.subr.mxu0 0.0
      %675 = vmatpush1.msra.mxu0 0.0
      %676 = vmatprep.subr.mxu0 0.0
      %677 = vmatpush1.msra.mxu0 0.0
      %678 = vmatprep.subr.mxu0 0.0
      %679 = vmatpush1.msra.mxu0 0.0
      %680 = vmatprep.subr.mxu0 0.0
      %681 = vmatpush1.msra.mxu0 0.0
      %682 = vmatprep.subr.mxu0 0.0
      %683 = vmatpush1.msra.mxu0 0.0
      %684 = vmatprep.subr.mxu0 0.0
      %685 = vmatpush1.msra.mxu0 0.0
      %686 = vmatprep.subr.mxu0 0.0
      %687 = vmatpush1.msra.mxu0 0.0
      %688 = vmatprep.subr.mxu0 0.0
      %689 = vmatpush1.msra.mxu0 0.0
      %690 = vmatprep.subr.mxu0 0.0
      %691 = vmatpush1.msra.mxu0 0.0
      %692 = vmatprep.subr.mxu0 0.0
      %693 = vmatpush1.msra.mxu0 0.0
      %694 = vmatprep.mubr.f32.mxu0 0.0
      %695 = vmatmul.mubr.f32.gmra.mrb[0].mxu0 %v615
      %v696 = vpop.f32.mrb[0].mxu0
      %v697 = vadd.f32 0.0, %v696
      %v698 = vpop.f32.mrb[0].mxu0
      %v699 = vadd.f32 0.0, %v698
      %700 = vmatprep.mubr.f32.mxu0 0.0
      %701 = vmatmul.mubr.f32.gmra.mrb[0].mxu0 %v618
      %v702 = vpop.f32.mrb[0].mxu0
      %v703 = vadd.f32 0.0, %v702
      %v704 = vpop.f32.mrb[0].mxu0
      %v705 = vadd.f32 0.0, %v704
      %706 = vdwg.mxu0
      %707 = vmatprep.subr.mxu0 0.0
      %708 = vmatpush1.msra.mxu0 %v597
      %709 = vmatprep.subr.mxu0 0.0
      %710 = vmatpush1.msra.mxu0 %v600
      %711 = vmatprep.subr.mxu0 0.0
      %712 = vmatpush1.msra.mxu0 %v603
      %713 = vmatprep.subr.mxu0 0.0
      %714 = vmatpush1.msra.mxu0 %v606
      %715 = vmatprep.subr.mxu0 0.0
      %716 = vmatpush1.msra.mxu0 %v609
      %717 = vmatprep.subr.mxu0 0.0
      %718 = vmatpush1.msra.mxu0 %v628
      %719 = vmatprep.subr.mxu0 0.0
      %720 = vmatpush1.msra.mxu0 0.0
      %721 = vmatprep.subr.mxu0 0.0
      %722 = vmatpush1.msra.mxu0 0.0
      %723 = vmatprep.subr.mxu0 0.0
      %724 = vmatpush1.msra.mxu0 0.0
      %725 = vmatprep.subr.mxu0 0.0
      %726 = vmatpush1.msra.mxu0 0.0
      %727 = vmatprep.subr.mxu0 0.0
      %728 = vmatpush1.msra.mxu0 0.0
      %729 = vmatprep.subr.mxu0 0.0
      %730 = vmatpush1.msra.mxu0 0.0
      %731 = vmatprep.subr.mxu0 0.0
      %732 = vmatpush1.msra.mxu0 0.0
      %733 = vmatprep.subr.mxu0 0.0
      %734 = vmatpush1.msra.mxu0 0.0
      %735 = vmatprep.subr.mxu0 0.0
      %736 = vmatpush1.msra.mxu0 0.0
      %737 = vmatprep.subr.mxu0 0.0
      %738 = vmatpush1.msra.mxu0 0.0
      %739 = vmatprep.subr.mxu0 0.0
      %740 = vmatpush1.msra.mxu0 0.0
      %741 = vmatprep.subr.mxu0 0.0
      %742 = vmatpush1.msra.mxu0 0.0
      %743 = vmatprep.subr.mxu0 0.0
      %744 = vmatpush1.msra.mxu0 0.0
      %745 = vmatprep.subr.mxu0 0.0
      %746 = vmatpush1.msra.mxu0 0.0
      %747 = vmatprep.subr.mxu0 0.0
      %748 = vmatpush1.msra.mxu0 0.0
      %749 = vmatprep.subr.mxu0 0.0
      %750 = vmatpush1.msra.mxu0 0.0
      %751 = vmatprep.subr.mxu0 0.0
      %752 = vmatpush1.msra.mxu0 0.0
      %753 = vmatprep.subr.mxu0 0.0
      %754 = vmatpush1.msra.mxu0 0.0
      %755 = vmatprep.subr.mxu0 0.0
      %756 = vmatpush1.msra.mxu0 0.0
      %757 = vmatprep.subr.mxu0 0.0
      %758 = vmatpush1.msra.mxu0 0.0
      %759 = vmatprep.subr.mxu0 0.0
      %760 = vmatpush1.msra.mxu0 0.0
      %761 = vmatprep.subr.mxu0 0.0
      %762 = vmatpush1.msra.mxu0 0.0
      %763 = vmatprep.subr.mxu0 0.0
      %764 = vmatpush1.msra.mxu0 0.0
      %765 = vmatprep.subr.mxu0 0.0
      %766 = vmatpush1.msra.mxu0 0.0
      %767 = vmatprep.subr.mxu0 0.0
      %768 = vmatpush1.msra.mxu0 0.0
      %769 = vmatprep.subr.mxu0 0.0
      %770 = vmatpush1.msra.mxu0 0.0
      %771 = vmatprep.mubr.f32.mxu0 0.0
      %772 = vmatmul.mubr.f32.gmra.mrb[0].mxu0 %v615
      %v773 = vpop.f32.mrb[0].mxu0
      %v774 = vadd.f32 0.0, %v773
      %v775 = vpop.f32.mrb[0].mxu0
      %776 = vmatprep.mubr.f32.mxu0 0.0
      %777 = vmatmul.mubr.f32.gmra.mrb[0].mxu0 %v618
      %v778 = vpop.f32.mrb[0].mxu0
      %v779 = vadd.f32 0.0, %v778
      %v780 = vpop.f32.mrb[0].mxu0
      %781 = vdwg.mxu0
      %vm782 = vcmp.ge.f32.partialorder %v703, 0.01
      %vm783 = vcmp.ge.f32.partialorder %v705, 0.01
      %vm784 = vcmp.ge.f32.partialorder %v779, 0.01
      %v785 = vsel %vm782, 1, 0
      %v786 = vsel %vm783, 1, 0
      %v787 = vsel %vm784, 1, 0
      %v788 = vcvt.s32.f32 %v785
      %v789 = vcvt.s32.f32 %v786
      %v790 = vcvt.s32.f32 %v787
      %v792 = vlaneseq
      %v793 = vshrl.u32 %v792, 7
      %v794 = vsub.s32 0, %v793
      %v795 = vrot.slane %v373, %v794
      %v796 = vlaneseq
      %v797 = vshrl.u32 %v796, 7
      %v798 = vsub.s32 1, %v797
      %v799 = vrot.slane %v373, %v798
      %v800 = vlaneseq
      %v801 = vshrl.u32 %v800, 7
      %v802 = vsub.s32 2, %v801
      %v803 = vrot.slane %v373, %v802
      %v807 = vmul.f32 %v788, %v795
      %v808 = vmul.f32 %v789, %v799
      %v809 = vmul.f32 %v790, %v803
      %v810 = vadd.f32 %v703, 1e-08
      %v811 = vadd.f32 %v705, 1e-08
      %v812 = vadd.f32 %v779, 1e-08
      %v813 = vrcp.pop %v810
      %v814 = vrcp.pop %v811
      %v815 = vrcp.pop %v812
      %v816 = vlaneseq
      %v817 = vshrl.u32 %v816, 7
      %v818 = vsub.s32 0, %v817
      %v819 = vrot.slane %v813, %v818
      %v820 = vlaneseq
      %v821 = vshrl.u32 %v820, 7
      %v822 = vsub.s32 0, %v821
      %v823 = vrot.slane %v814, %v822
      %v824 = vlaneseq
      %v825 = vshrl.u32 %v824, 7
      %v826 = vsub.s32 0, %v825
      %v827 = vrot.slane %v815, %v826
      %v828 = vmul.f32 %v697, %v819
      %v829 = vmul.f32 %v699, %v823
      %v830 = vmul.f32 %v774, %v827
      %v831 = vld [vmem:[%s2] sm:$0xff]
      %833 = vset.pattern.permute.xlu0 0
      %834 = vperm.xlu0 %833, %v831
      %v835 = vpop.permute.xlu0 %834
      %v837 = vadd.f32 %v828, %v835
      %v838 = vadd.f32 %v829, %v835
      %v839 = vadd.f32 %v830, %v835
      %v840 = vlaneseq
      %v841 = vshrl.u32 %v840, 7
      %v842 = vsub.s32 0, %v841
      %v843 = vrot.slane %v807, %v842
      %v844 = vlaneseq
      %v845 = vshrl.u32 %v844, 7
      %v846 = vsub.s32 0, %v845
      %v847 = vrot.slane %v808, %v846
      %v848 = vlaneseq
      %v849 = vshrl.u32 %v848, 7
      %v850 = vsub.s32 0, %v849
      %v851 = vrot.slane %v809, %v850
      %v852 = vmul.f32 %v837, %v843
      %v853 = vmul.f32 %v838, %v847
      %v854 = vmul.f32 %v839, %v851
      %855 = vst [vmem:[#allocation3] sm:$0xff] 0.0
      %856 = vst [vmem:[#allocation3 + $0x8] sm:$0xff] 0.0
      %vm857 = vcmask 572416
      %858 = vst.msk [vmem:[#allocation3 + $0x10] sm:$0xff] %vm857, 0.0
      %859 = vst [vmem:[#allocation3 + $0x18] sm:$0x1] 0.0
      %860 = vst [vmem:[#allocation3 + $0x20] sm:$0x1] 0.0
      %vm861 = vcmask 565248
      %862 = vst.msk [vmem:[#allocation3 + $0x28] sm:$0x1] %vm861, 0.0
      %vm863 = vcmask 1043456
      %v864 = vsel %vm863, %v852, 0.0
      %v865 = vsel %vm863, %v853, 0.0
      %v866 = vadd.f32 %v864, %v865
      %v867 = vsel %vm462, %v854, 0.0
      %v868 = vadd.f32 %v866, %v867
      %869 = vadd.xlane.f32.xlu0 %v868
      %v870 = vpop.xlane.xlu0 %869
      %v871 = vsel %vm863, %v870, 0.0
      %v872 = vrot.slane %v871, 4
      %v873 = vadd.f32 %v871, %v872
      %v874 = vrot.slane %v873, 2
      %v875 = vadd.f32 %v873, %v874
      %v876 = vrot.slane %v875, 1
      %v877 = vadd.f32 %v875, %v876
      %v878 = vmul.f32 %v852, %v852
      %v879 = vmul.f32 %v853, %v853
      %v880 = vmul.f32 %v854, %v854
      %v881 = vsel %vm863, %v878, 0.0
      %v882 = vsel %vm863, %v879, 0.0
      %v883 = vadd.f32 %v881, %v882
      %v884 = vsel %vm462, %v880, 0.0
      %v885 = vadd.f32 %v883, %v884
      %886 = vadd.xlane.f32.xlu0 %v885
      %v887 = vpop.xlane.xlu0 %886
      %v888 = vsel %vm863, %v887, 0.0
      %v889 = vrot.slane %v888, 4
      %v890 = vadd.f32 %v888, %v889
      %v891 = vrot.slane %v890, 2
      %v892 = vadd.f32 %v890, %v891
      %v893 = vrot.slane %v892, 1
      %v894 = vadd.f32 %v892, %v893
      %v895 = vmul.f32 %v877, 0.0009765625
      %v896 = vmul.f32 %v894, 0.0009765625
      %v897 = vmul.f32 %v895, %v895
      %v898 = vsub.f32 %v896, %v897
      %v899 = vmax.f32 %v898, 0.0
      %v900 = vadd.f32 %v899, 1e-05
      %v901 = vrsqrt.pop %v900
      %v902 = vsub.f32 %v852, %v895
      %v903 = vsub.f32 %v853, %v895
      %v904 = vsub.f32 %v854, %v895
      %v905 = vmul.f32 %v902, %v901
      %v906 = vmul.f32 %v903, %v901
      %v907 = vmul.f32 %v904, %v901
      %v908 = vld [vmem:[%s3] sm:$0xf]
      %910 = vset.pattern.permute.xlu0 0
      %911 = vperm.xlu0 %910, %v908
      %v912 = vpop.permute.xlu0 %911
      %v914 = vmul.f32 %v905, %v912
      %v915 = vmul.f32 %v906, %v912
      %v916 = vmul.f32 %v907, %v912
      %v917 = vld [vmem:[%s4] sm:$0xf]
      %919 = vset.pattern.permute.xlu0 0
      %920 = vperm.xlu0 %919, %v917
      %v921 = vpop.permute.xlu0 %920
      %v923 = vadd.f32 %v914, %v921
      %v924 = vadd.f32 %v915, %v921
      %v925 = vadd.f32 %v916, %v921
      %v926 = vmax.f32 %v923, 0.0
      %v927 = vmax.f32 %v924, 0.0
      %v928 = vmax.f32 %v925, 0.0
      %v929 = vmul.f32 %v926, %v843
      %v930 = vmul.f32 %v927, %v847
      %v931 = vmul.f32 %v928, %v851
      %935 = vrot.lane.b32.xlu0 %v929, 19
      %v936 = vpop.permute.xlu0 %935
      %937 = vrot.lane.b32.xlu0 %v930, 19
      %v938 = vpop.permute.xlu0 %937
      %939 = vrot.lane.b32.xlu0 %v931, 19
      %v940 = vpop.permute.xlu0 %939
      %vm941 = vcmask 154624
      %v942 = vsel %vm941, %v936, %v938
      %v943 = vsel %vm941, %v938, %v940
      %vm947 = vcmask 1043608
      %948 = vst.msk [vmem:[#allocation3] sm:$0xf] %vm947, %v936
      %949 = vst [vmem:[#allocation3 + $0x8] sm:$0xf] %v942
      %vm950 = vcmask 412672
      %951 = vst.msk [vmem:[#allocation3 + $0x10] sm:$0xf] %vm950, %v943
      %vm952 = vcmask 1047556
      %v953 = vsel %vm952, %v852, 0.0
      %v954 = vsel %vm952, %v853, 0.0
      %v955 = vadd.f32 %v953, %v954
      %v956 = vsel %vm487, %v854, 0.0
      %v957 = vadd.f32 %v955, %v956
      %958 = vadd.xlane.f32.xlu0 %v957
      %v959 = vpop.xlane.xlu0 %958
      %v961 = vrot.slane %v959, 4
      %v963 = vsel %vm863, %v961, 0.0
      %v964 = vrot.slane %v963, 4
      %v965 = vadd.f32 %v963, %v964
      %v966 = vrot.slane %v965, 2
      %v967 = vadd.f32 %v965, %v966
      %v968 = vrot.slane %v967, 1
      %v969 = vadd.f32 %v967, %v968
      %v970 = vsel %vm952, %v878, 0.0
      %v971 = vsel %vm952, %v879, 0.0
      %v972 = vadd.f32 %v970, %v971
      %v973 = vsel %vm487, %v880, 0.0
      %v974 = vadd.f32 %v972, %v973
      %975 = vadd.xlane.f32.xlu0 %v974
      %v976 = vpop.xlane.xlu0 %975
      %v978 = vrot.slane %v976, 4
      %v980 = vsel %vm863, %v978, 0.0
      %v981 = vrot.slane %v980, 4
      %v982 = vadd.f32 %v980, %v981
      %v983 = vrot.slane %v982, 2
      %v984 = vadd.f32 %v982, %v983
      %v985 = vrot.slane %v984, 1
      %v986 = vadd.f32 %v984, %v985
      %v987 = vmul.f32 %v969, 0.0009765625
      %v988 = vmul.f32 %v986, 0.0009765625
      %v989 = vmul.f32 %v987, %v987
      %v990 = vsub.f32 %v988, %v989
      %v991 = vmax.f32 %v990, 0.0
      %v992 = vadd.f32 %v991, 1e-05
      %v993 = vrsqrt.pop %v992
      %v994 = vsub.f32 %v852, %v987
      %v995 = vsub.f32 %v853, %v987
      %v996 = vsub.f32 %v854, %v987
      %v997 = vmul.f32 %v994, %v993
      %v998 = vmul.f32 %v995, %v993
      %v999 = vmul.f32 %v996, %v993
      %v1000 = vld [vmem:[%s3 + $0x4] sm:$0xf]
      %1002 = vset.pattern.permute.xlu0 0
      %1003 = vperm.xlu0 %1002, %v1000
      %v1004 = vpop.permute.xlu0 %1003
      %v1005 = vrot.slane %v1004, 4
      %v1007 = vmul.f32 %v997, %v1005
      %v1008 = vmul.f32 %v998, %v1005
      %v1009 = vmul.f32 %v999, %v1005
      %v1010 = vld [vmem:[%s4 + $0x4] sm:$0xf]
      %1012 = vset.pattern.permute.xlu0 0
      %1013 = vperm.xlu0 %1012, %v1010
      %v1014 = vpop.permute.xlu0 %1013
      %v1015 = vrot.slane %v1014, 4
      %v1017 = vadd.f32 %v1007, %v1015
      %v1018 = vadd.f32 %v1008, %v1015
      %v1019 = vadd.f32 %v1009, %v1015
      %v1020 = vmax.f32 %v1017, 0.0
      %v1021 = vmax.f32 %v1018, 0.0
      %v1022 = vmax.f32 %v1019, 0.0
      %v1023 = vmul.f32 %v1020, %v843
      %v1024 = vmul.f32 %v1021, %v847
      %v1025 = vmul.f32 %v1022, %v851
      %1029 = vrot.lane.b32.xlu0 %v1023, 19
      %v1030 = vpop.permute.xlu0 %1029
      %1031 = vrot.lane.b32.xlu0 %v1024, 19
      %v1032 = vpop.permute.xlu0 %1031
      %1033 = vrot.lane.b32.xlu0 %v1025, 19
      %v1034 = vpop.permute.xlu0 %1033
      %v1035 = vsel %vm941, %v1030, %v1032
      %v1036 = vsel %vm941, %v1032, %v1034
      %vm1040 = vcmask 1047708
      %1041 = vst.msk [vmem:[#allocation3] sm:$0xf0] %vm1040, %v1030
      %1042 = vst [vmem:[#allocation3 + $0x8] sm:$0xf0] %v1035
      %vm1043 = vcmask 416772
      %1044 = vst.msk [vmem:[#allocation3 + $0x10] sm:$0xf0] %vm1043, %v1036
      %v1048 = vcombine.low %v807, %v808
      %v1050 = vunpack.c.l.s4 1966171168
      %v1051 = vunpack.c.0.s8 %v1050
      %v1052 = vlaneseq
      %v1053 = vshrl.u32 %v1052, 7
      %v1054 = vsub.s32 %v1051, %v1053
      %v1055 = vrot.slane %v1048, %v1054
      %v1057 = vunpack.c.l.s4 1966171168
      %v1058 = vunpack.c.0.s8 %v1057
      %v1059 = vlaneseq
      %v1060 = vshrl.u32 %v1059, 7
      %v1061 = vsub.s32 %v1058, %v1060
      %v1062 = vrot.slane %v809, %v1061
      %v1063 = vcombine.low %v1055, %v1062
      %v1065 = vunpack.c.l.s4 1966171168
      %v1066 = vunpack.c.0.s8 %v1065
      %v1067 = vlaneseq
      %v1068 = vshrl.u32 %v1067, 7
      %v1069 = vsub.s32 %v1066, %v1068
      %v1070 = vrot.slane %v1063, %v1069
      %1071 = vrot.lane.b32.xlu0 %v1070, 19
      %v1072 = vpop.permute.xlu0 %1071
      %v1073 = vrot.slane %v1072, 7
      %v1074 = vsel %vm941, %v1073, %v1072
      %v1076 = vlaneseq
      %vm1077 = vcmp.ge.s32.totalorder %v1076, 19
      %vm1078 = vcmp.lt.s32.totalorder %v1076, 307
      %vm1079 = vmand %vm1077, %vm1078
      %s1080 = scalar_lea.vmem [#allocation3], 24
      %1081 = vst.msk [vmem:[%s1080] ss:$8 sm:$0x7] %vm1079, %v1074
      %1082 = vst.msk [vmem:[%s1080] ss:$8 sm:$0x0] %vm1079, %v1074
      %v1083 = vld [vmem:[#allocation3] sm:$0xff]
      %v1084 = vld [vmem:[#allocation3 + $0x8] sm:$0xff]
      %v1085 = vld [vmem:[#allocation3 + $0x10] sm:$0xff]
      %v1086 = vld [vmem:[#allocation3 + $0x18] sm:$0x1]
      %v1087 = vld [vmem:[#allocation3 + $0x20] sm:$0x1]
      %v1088 = vld [vmem:[#allocation3 + $0x28] sm:$0x1]
      %1089 = vst [vmem:[#allocation2] sm:$0xff] %v1083
      %1090 = vst [vmem:[#allocation2 + $0x8] sm:$0xff] %v1084
      %vm1091 = vcmask 261120
      %1092 = vst.msk [vmem:[#allocation2 + $0x10] sm:$0xff] %vm1091, %v1085
      %1093 = vst [vmem:[#allocation2 + $0x18] sm:$0x1] %v1086
      %1094 = vst [vmem:[#allocation2 + $0x20] sm:$0x1] %v1087
      %1095 = vst.msk [vmem:[#allocation2 + $0x28] sm:$0x1] %vm491, %v1088
      %v1096 = vld [vmem:[#allocation3] sm:$0xff]
      %v1097 = vld [vmem:[#allocation3 + $0x8] sm:$0xff]
      %v1098 = vld [vmem:[#allocation3 + $0x10] sm:$0xff]
      %v1099 = vld [vmem:[#allocation3 + $0x18] sm:$0x1]
      %v1100 = vld [vmem:[#allocation3 + $0x20] sm:$0x1]
      %v1101 = vld [vmem:[#allocation3 + $0x28] sm:$0x1]
      %vm1108 = vcmask 1040384
      %v1109 = vrot.slane %v1096, 7
      %v1110 = vrot.slane %v1097, 7
      %v1111 = vrot.slane %v1098, 7
      %v1112 = vrot.slane %v1099, 7
      %v1113 = vsel %vm1108, %v1109, %v1112
      %v1114 = vrot.slane %v1100, 7
      %v1115 = vsel %vm1108, %v1110, %v1114
      %v1116 = vrot.slane %v1101, 7
      %v1117 = vsel %vm1108, %v1111, %v1116
      %1118 = vrot.lane.b32.xlu0 %v1109, 127
      %v1119 = vpop.permute.xlu0 %1118
      %1120 = vrot.lane.b32.xlu0 %v1110, 127
      %v1121 = vpop.permute.xlu0 %1120
      %1122 = vrot.lane.b32.xlu0 %v1111, 127
      %v1123 = vpop.permute.xlu0 %1122
      %1124 = vrot.lane.b32.xlu0 %v1113, 127
      %v1125 = vpop.permute.xlu0 %1124
      %1126 = vrot.lane.b32.xlu0 %v1115, 127
      %v1127 = vpop.permute.xlu0 %1126
      %1128 = vrot.lane.b32.xlu0 %v1117, 127
      %v1129 = vpop.permute.xlu0 %1128
      %v1130 = vsel %vm396, %v1119, %v1121
      %v1131 = vsel %vm396, %v1121, %v1123
      %v1132 = vsel %vm396, %v1125, %v1127
      %v1133 = vsel %vm396, %v1127, %v1129
      %1140 = vst [vmem:[#allocation2 + $0x18] sm:$0xfe] %v1130
      %1141 = vst [vmem:[#allocation2 + $0x20] sm:$0xfe] %v1131
      %vm1142 = vcmask 261121
      %1143 = vst.msk [vmem:[#allocation2 + $0x28] sm:$0xfe] %vm1142, %v1123
      %1144 = vst [vmem:[#allocation2 + $0x30] sm:$0x3] %v1132
      %1145 = vst [vmem:[#allocation2 + $0x38] sm:$0x3] %v1133
      %1146 = vst.msk [vmem:[#allocation2 + $0x40] sm:$0x3] %vm408, %v1129
      %v1147 = vld [vmem:[#allocation3] sm:$0xff]
      %v1148 = vld [vmem:[#allocation3 + $0x8] sm:$0xff]
      %v1149 = vld [vmem:[#allocation3 + $0x10] sm:$0xff]
      %v1150 = vld [vmem:[#allocation3 + $0x18] sm:$0x1]
      %v1151 = vld [vmem:[#allocation3 + $0x20] sm:$0x1]
      %v1152 = vld [vmem:[#allocation3 + $0x28] sm:$0x1]
      %vm1159 = vcmask 1041408
      %v1160 = vrot.slane %v1147, 6
      %v1161 = vrot.slane %v1148, 6
      %v1162 = vrot.slane %v1149, 6
      %v1163 = vrot.slane %v1150, 6
      %v1164 = vsel %vm1159, %v1160, %v1163
      %v1165 = vrot.slane %v1151, 6
      %v1166 = vsel %vm1159, %v1161, %v1165
      %v1167 = vrot.slane %v1152, 6
      %v1168 = vsel %vm1159, %v1162, %v1167
      %1169 = vrot.lane.b32.xlu0 %v1160, 126
      %v1170 = vpop.permute.xlu0 %1169
      %1171 = vrot.lane.b32.xlu0 %v1161, 126
      %v1172 = vpop.permute.xlu0 %1171
      %1173 = vrot.lane.b32.xlu0 %v1162, 126
      %v1174 = vpop.permute.xlu0 %1173
      %1175 = vrot.lane.b32.xlu0 %v1164, 126
      %v1176 = vpop.permute.xlu0 %1175
      %1177 = vrot.lane.b32.xlu0 %v1166, 126
      %v1178 = vpop.permute.xlu0 %1177
      %1179 = vrot.lane.b32.xlu0 %v1168, 126
      %v1180 = vpop.permute.xlu0 %1179
      %v1181 = vsel %vm425, %v1170, %v1172
      %v1182 = vsel %vm425, %v1172, %v1174
      %v1183 = vsel %vm425, %v1176, %v1178
      %v1184 = vsel %vm425, %v1178, %v1180
      %1191 = vst [vmem:[#allocation2 + $0x30] sm:$0xfc] %v1181
      %1192 = vst [vmem:[#allocation2 + $0x38] sm:$0xfc] %v1182
      %vm1193 = vcmask 261122
      %1194 = vst.msk [vmem:[#allocation2 + $0x40] sm:$0xfc] %vm1193, %v1174
      %1195 = vst [vmem:[#allocation2 + $0x48] sm:$0x7] %v1183
      %1196 = vst [vmem:[#allocation2 + $0x50] sm:$0x7] %v1184
      %1197 = vst.msk [vmem:[#allocation2 + $0x58] sm:$0x7] %vm545, %v1180
      %v1198 = vld [vmem:[#allocation3] sm:$0xff]
      %v1199 = vld [vmem:[#allocation3 + $0x8] sm:$0xff]
      %v1200 = vld [vmem:[#allocation3 + $0x10] sm:$0xff]
      %v1201 = vld [vmem:[#allocation3 + $0x18] sm:$0x1]
      %v1202 = vld [vmem:[#allocation3 + $0x20] sm:$0x1]
      %v1203 = vld [vmem:[#allocation3 + $0x28] sm:$0x1]
      %vm1210 = vcmask 1042432
      %v1211 = vrot.slane %v1198, 5
      %v1212 = vrot.slane %v1199, 5
      %v1213 = vrot.slane %v1200, 5
      %v1214 = vrot.slane %v1201, 5
      %v1215 = vsel %vm1210, %v1211, %v1214
      %v1216 = vrot.slane %v1202, 5
      %v1217 = vsel %vm1210, %v1212, %v1216
      %v1218 = vrot.slane %v1203, 5
      %v1219 = vsel %vm1210, %v1213, %v1218
      %1220 = vrot.lane.b32.xlu0 %v1211, 110
      %v1221 = vpop.permute.xlu0 %1220
      %1222 = vrot.lane.b32.xlu0 %v1212, 110
      %v1223 = vpop.permute.xlu0 %1222
      %1224 = vrot.lane.b32.xlu0 %v1213, 110
      %v1225 = vpop.permute.xlu0 %1224
      %1226 = vrot.lane.b32.xlu0 %v1215, 110
      %v1227 = vpop.permute.xlu0 %1226
      %1228 = vrot.lane.b32.xlu0 %v1217, 110
      %v1229 = vpop.permute.xlu0 %1228
      %1230 = vrot.lane.b32.xlu0 %v1219, 110
      %v1231 = vpop.permute.xlu0 %1230
      %v1232 = vsel %vm450, %v1221, %v1223
      %v1233 = vsel %vm450, %v1223, %v1225
      %v1234 = vsel %vm450, %v1227, %v1229
      %v1235 = vsel %vm450, %v1229, %v1231
      %1242 = vst [vmem:[#allocation2 + $0x48] sm:$0xf8] %v1232
      %1243 = vst [vmem:[#allocation2 + $0x50] sm:$0xf8] %v1233
      %1244 = vst.msk [vmem:[#allocation2 + $0x58] sm:$0xf8] %vm570, %v1225
      %1245 = vst [vmem:[#allocation2 + $0x60] sm:$0xf] %v1234
      %1246 = vst [vmem:[#allocation2 + $0x68] sm:$0xf] %v1235
      %1247 = vst.msk [vmem:[#allocation2 + $0x70] sm:$0xf] %vm462, %v1231
      %v1248 = vld [vmem:[#allocation3] sm:$0xff]
      %v1249 = vld [vmem:[#allocation3 + $0x8] sm:$0xff]
      %v1250 = vld [vmem:[#allocation3 + $0x10] sm:$0xff]
      %v1251 = vld [vmem:[#allocation3 + $0x18] sm:$0x1]
      %v1252 = vld [vmem:[#allocation3 + $0x20] sm:$0x1]
      %v1253 = vld [vmem:[#allocation3 + $0x28] sm:$0x1]
      %v1260 = vrot.slane %v1248, 4
      %v1261 = vrot.slane %v1249, 4
      %v1262 = vrot.slane %v1250, 4
      %v1263 = vrot.slane %v1251, 4
      %v1264 = vsel %vm863, %v1260, %v1263
      %v1265 = vrot.slane %v1252, 4
      %v1266 = vsel %vm863, %v1261, %v1265
      %v1267 = vrot.slane %v1253, 4
      %v1268 = vsel %vm863, %v1262, %v1267
      %1269 = vrot.lane.b32.xlu0 %v1260, 109
      %v1270 = vpop.permute.xlu0 %1269
      %1271 = vrot.lane.b32.xlu0 %v1261, 109
      %v1272 = vpop.permute.xlu0 %1271
      %1273 = vrot.lane.b32.xlu0 %v1262, 109
      %v1274 = vpop.permute.xlu0 %1273
      %1275 = vrot.lane.b32.xlu0 %v1264, 109
      %v1276 = vpop.permute.xlu0 %1275
      %1277 = vrot.lane.b32.xlu0 %v1266, 109
      %v1278 = vpop.permute.xlu0 %1277
      %1279 = vrot.lane.b32.xlu0 %v1268, 109
      %v1280 = vpop.permute.xlu0 %1279
      %v1281 = vsel %vm479, %v1270, %v1272
      %v1282 = vsel %vm479, %v1272, %v1274
      %v1283 = vsel %vm479, %v1276, %v1278
      %v1284 = vsel %vm479, %v1278, %v1280
      %1291 = vst [vmem:[#allocation2 + $0x60] sm:$0xf0] %v1281
      %1292 = vst [vmem:[#allocation2 + $0x68] sm:$0xf0] %v1282
      %1293 = vst.msk [vmem:[#allocation2 + $0x70] sm:$0xf0] %vm487, %v1274
      %1294 = vst [vmem:[#allocation2 + $0x78] sm:$0x1f] %v1283
      %1295 = vst [vmem:[#allocation2 + $0x80] sm:$0x1f] %v1284
      %1296 = vst.msk [vmem:[#allocation2 + $0x88] sm:$0x1f] %vm379, %v1280
      %v1297 = vld [vmem:[#allocation3] sm:$0xff]
      %v1298 = vld [vmem:[#allocation3 + $0x8] sm:$0xff]
      %v1299 = vld [vmem:[#allocation3 + $0x10] sm:$0xff]
      %v1300 = vld [vmem:[#allocation3 + $0x18] sm:$0x1]
      %v1301 = vld [vmem:[#allocation3 + $0x20] sm:$0x1]
      %v1302 = vld [vmem:[#allocation3 + $0x28] sm:$0x1]
      %v1309 = vrot.slane %v1297, 3
      %v1310 = vrot.slane %v1298, 3
      %v1311 = vrot.slane %v1299, 3
      %v1312 = vrot.slane %v1300, 3
      %v1313 = vsel %vm620, %v1309, %v1312
      %v1314 = vrot.slane %v1301, 3
      %v1315 = vsel %vm620, %v1310, %v1314
      %v1316 = vrot.slane %v1302, 3
      %v1317 = vsel %vm620, %v1311, %v1316
      %1318 = vrot.lane.b32.xlu0 %v1309, 108
      %v1319 = vpop.permute.xlu0 %1318
      %1320 = vrot.lane.b32.xlu0 %v1310, 108
      %v1321 = vpop.permute.xlu0 %1320
      %1322 = vrot.lane.b32.xlu0 %v1311, 108
      %v1323 = vpop.permute.xlu0 %1322
      %1324 = vrot.lane.b32.xlu0 %v1313, 108
      %v1325 = vpop.permute.xlu0 %1324
      %1326 = vrot.lane.b32.xlu0 %v1315, 108
      %v1327 = vpop.permute.xlu0 %1326
      %1328 = vrot.lane.b32.xlu0 %v1317, 108
      %v1329 = vpop.permute.xlu0 %1328
      %v1330 = vsel %vm508, %v1319, %v1321
      %v1331 = vsel %vm508, %v1321, %v1323
      %v1332 = vsel %vm508, %v1325, %v1327
      %v1333 = vsel %vm508, %v1327, %v1329
      %1340 = vst [vmem:[#allocation2 + $0x78] sm:$0xe0] %v1330
      %1341 = vst [vmem:[#allocation2 + $0x80] sm:$0xe0] %v1331
      %1342 = vst.msk [vmem:[#allocation2 + $0x88] sm:$0xe0] %vm404, %v1323
      %1343 = vst [vmem:[#allocation2 + $0x90] sm:$0x3f] %v1332
      %1344 = vst [vmem:[#allocation2 + $0x98] sm:$0x3f] %v1333
      %vm1345 = vcmask 259072
      %1346 = vst.msk [vmem:[#allocation2 + $0xa0] sm:$0x3f] %vm1345, %v1329
      %v1347 = vld [vmem:[#allocation3] sm:$0xff]
      %v1348 = vld [vmem:[#allocation3 + $0x8] sm:$0xff]
      %v1349 = vld [vmem:[#allocation3 + $0x10] sm:$0xff]
      %v1350 = vld [vmem:[#allocation3 + $0x18] sm:$0x1]
      %v1351 = vld [vmem:[#allocation3 + $0x20] sm:$0x1]
      %v1352 = vld [vmem:[#allocation3 + $0x28] sm:$0x1]
      %vm1359 = vcmask 1045504
      %v1360 = vrot.slane %v1347, 2
      %v1361 = vrot.slane %v1348, 2
      %v1362 = vrot.slane %v1349, 2
      %v1363 = vrot.slane %v1350, 2
      %v1364 = vsel %vm1359, %v1360, %v1363
      %v1365 = vrot.slane %v1351, 2
      %v1366 = vsel %vm1359, %v1361, %v1365
      %v1367 = vrot.slane %v1352, 2
      %v1368 = vsel %vm1359, %v1362, %v1367
      %1369 = vrot.lane.b32.xlu0 %v1360, 92
      %v1370 = vpop.permute.xlu0 %1369
      %1371 = vrot.lane.b32.xlu0 %v1361, 92
      %v1372 = vpop.permute.xlu0 %1371
      %1373 = vrot.lane.b32.xlu0 %v1362, 92
      %v1374 = vpop.permute.xlu0 %1373
      %1375 = vrot.lane.b32.xlu0 %v1364, 92
      %v1376 = vpop.permute.xlu0 %1375
      %1377 = vrot.lane.b32.xlu0 %v1366, 92
      %v1378 = vpop.permute.xlu0 %1377
      %1379 = vrot.lane.b32.xlu0 %v1368, 92
      %v1380 = vpop.permute.xlu0 %1379
      %v1381 = vsel %vm533, %v1370, %v1372
      %v1382 = vsel %vm533, %v1372, %v1374
      %v1383 = vsel %vm533, %v1376, %v1378
      %v1384 = vsel %vm533, %v1378, %v1380
      %1391 = vst [vmem:[#allocation2 + $0x90] sm:$0xc0] %v1381
      %1392 = vst [vmem:[#allocation2 + $0x98] sm:$0xc0] %v1382
      %1393 = vst.msk [vmem:[#allocation2 + $0xa0] sm:$0xc0] %vm541, %v1374
      %1394 = vst [vmem:[#allocation2 + $0xa8] sm:$0x7f] %v1383
      %1395 = vst [vmem:[#allocation2 + $0xb0] sm:$0x7f] %v1384
      %vm1396 = vcmask 260096
      %1397 = vst.msk [vmem:[#allocation2 + $0xb8] sm:$0x7f] %vm1396, %v1380
      %v1398 = vld [vmem:[#allocation3] sm:$0xff]
      %v1399 = vld [vmem:[#allocation3 + $0x8] sm:$0xff]
      %v1400 = vld [vmem:[#allocation3 + $0x10] sm:$0xff]
      %v1401 = vld [vmem:[#allocation3 + $0x18] sm:$0x1]
      %v1402 = vld [vmem:[#allocation3 + $0x20] sm:$0x1]
      %v1403 = vld [vmem:[#allocation3 + $0x28] sm:$0x1]
      %vm1410 = vcmask 1046528
      %v1411 = vrot.slane %v1398, 1
      %v1412 = vrot.slane %v1399, 1
      %v1413 = vrot.slane %v1400, 1
      %v1414 = vrot.slane %v1401, 1
      %v1415 = vsel %vm1410, %v1411, %v1414
      %v1416 = vrot.slane %v1402, 1
      %v1417 = vsel %vm1410, %v1412, %v1416
      %v1418 = vrot.slane %v1403, 1
      %v1419 = vsel %vm1410, %v1413, %v1418
      %1420 = vrot.lane.b32.xlu0 %v1411, 91
      %v1421 = vpop.permute.xlu0 %1420
      %1422 = vrot.lane.b32.xlu0 %v1412, 91
      %v1423 = vpop.permute.xlu0 %1422
      %1424 = vrot.lane.b32.xlu0 %v1413, 91
      %v1425 = vpop.permute.xlu0 %1424
      %1426 = vrot.lane.b32.xlu0 %v1415, 91
      %v1427 = vpop.permute.xlu0 %1426
      %1428 = vrot.lane.b32.xlu0 %v1417, 91
      %v1429 = vpop.permute.xlu0 %1428
      %1430 = vrot.lane.b32.xlu0 %v1419, 91
      %v1431 = vpop.permute.xlu0 %1430
      %v1432 = vsel %vm562, %v1421, %v1423
      %v1433 = vsel %vm562, %v1423, %v1425
      %v1434 = vsel %vm562, %v1427, %v1429
      %v1435 = vsel %vm562, %v1429, %v1431
      %1442 = vst [vmem:[#allocation2 + $0xa8] sm:$0x80] %v1432
      %1443 = vst [vmem:[#allocation2 + $0xb0] sm:$0x80] %v1433
      %1444 = vst.msk [vmem:[#allocation2 + $0xb8] sm:$0x80] %vm458, %v1425
      %1445 = vst [vmem:[#allocation2 + $0xc0] sm:$0xff] %v1434
      %1446 = vst [vmem:[#allocation2 + $0xc8] sm:$0xff] %v1435
      %1447 = vst.msk [vmem:[#allocation2 + $0xd0] sm:$0xff] %vm1091, %v1431
      %v1448 = vld [vmem:[#allocation3] sm:$0xff]
      %v1449 = vld [vmem:[#allocation3 + $0x8] sm:$0xff]
      %v1450 = vld [vmem:[#allocation3 + $0x10] sm:$0xff]
      %v1451 = vld [vmem:[#allocation3 + $0x18] sm:$0x1]
      %v1452 = vld [vmem:[#allocation3 + $0x20] sm:$0x1]
      %v1453 = vld [vmem:[#allocation3 + $0x28] sm:$0x1]
      %1460 = vrot.lane.b32.xlu0 %v1448, 90
      %v1461 = vpop.permute.xlu0 %1460
      %1462 = vrot.lane.b32.xlu0 %v1449, 90
      %v1463 = vpop.permute.xlu0 %1462
      %1464 = vrot.lane.b32.xlu0 %v1450, 90
      %v1465 = vpop.permute.xlu0 %1464
      %1466 = vrot.lane.b32.xlu0 %v1451, 90
      %v1467 = vpop.permute.xlu0 %1466
      %1468 = vrot.lane.b32.xlu0 %v1452, 90
      %v1469 = vpop.permute.xlu0 %1468
      %1470 = vrot.lane.b32.xlu0 %v1453, 90
      %v1471 = vpop.permute.xlu0 %1470
      %v1472 = vsel %vm584, %v1461, %v1463
      %v1473 = vsel %vm584, %v1463, %v1465
      %v1474 = vsel %vm584, %v1467, %v1469
      %v1475 = vsel %vm584, %v1469, %v1471
      %1482 = vst [vmem:[#allocation2 + $0xd8] sm:$0xff] %v1472
      %1483 = vst [vmem:[#allocation2 + $0xe0] sm:$0xff] %v1473
      %1484 = vst.msk [vmem:[#allocation2 + $0xe8] sm:$0xff] %vm1091, %v1465
      %1485 = vst [vmem:[#allocation2 + $0xf0] sm:$0x1] %v1474
      %1486 = vst [vmem:[#allocation2 + $0xf8] sm:$0x1] %v1475
      %1487 = vst.msk [vmem:[#allocation2 + $0x100] sm:$0x1] %vm491, %v1471
      %v1488 = vld [vmem:[%s5] sm:$0xff]
      %v1489 = vld [vmem:[%s5 + $0x8] sm:$0x1]
      %v1490 = vld [vmem:[#allocation2] sm:$0xff]
      %v1491 = vld [vmem:[#allocation2 + $0x8] sm:$0xff]
      %v1492 = vld [vmem:[#allocation2 + $0x10] sm:$0xff]
      %v1493 = vld [vmem:[#allocation2 + $0x18] sm:$0xff]
      %v1494 = vld [vmem:[#allocation2 + $0x20] sm:$0xff]
      %v1495 = vld [vmem:[#allocation2 + $0x28] sm:$0xff]
      %v1496 = vld [vmem:[#allocation2 + $0x30] sm:$0xff]
      %v1497 = vld [vmem:[#allocation2 + $0x38] sm:$0xff]
      %v1498 = vld [vmem:[#allocation2 + $0x40] sm:$0xff]
      %v1499 = vld [vmem:[#allocation2 + $0x48] sm:$0xff]
      %v1500 = vld [vmem:[#allocation2 + $0x50] sm:$0xff]
      %v1501 = vld [vmem:[#allocation2 + $0x58] sm:$0xff]
      %v1502 = vld [vmem:[#allocation2 + $0x60] sm:$0xff]
      %v1503 = vld [vmem:[#allocation2 + $0x68] sm:$0xff]
      %v1504 = vld [vmem:[#allocation2 + $0x70] sm:$0xff]
      %v1505 = vld [vmem:[#allocation2 + $0x78] sm:$0xff]
      %v1506 = vld [vmem:[#allocation2 + $0x80] sm:$0xff]
      %v1507 = vld [vmem:[#allocation2 + $0x88] sm:$0xff]
      %v1508 = vld [vmem:[#allocation2 + $0x90] sm:$0xff]
      %v1509 = vld [vmem:[#allocation2 + $0x98] sm:$0xff]
      %v1510 = vld [vmem:[#allocation2 + $0xa0] sm:$0xff]
      %v1511 = vld [vmem:[#allocation2 + $0xa8] sm:$0xff]
      %v1512 = vld [vmem:[#allocation2 + $0xb0] sm:$0xff]
      %v1513 = vld [vmem:[#allocation2 + $0xb8] sm:$0xff]
      %v1514 = vld [vmem:[#allocation2 + $0xc0] sm:$0xff]
      %v1515 = vld [vmem:[#allocation2 + $0xc8] sm:$0xff]
      %v1516 = vld [vmem:[#allocation2 + $0xd0] sm:$0xff]
      %v1517 = vld [vmem:[#allocation2 + $0xd8] sm:$0xff]
      %v1518 = vld [vmem:[#allocation2 + $0xe0] sm:$0xff]
      %v1519 = vld [vmem:[#allocation2 + $0xe8] sm:$0xff]
      %v1520 = vld [vmem:[#allocation2 + $0xf0] sm:$0x1]
      %v1521 = vld [vmem:[#allocation2 + $0xf8] sm:$0x1]
      %v1522 = vld [vmem:[#allocation2 + $0x100] sm:$0x1]
      %vm1523 = vcmask 662528
      %v1525 = vsel %vm1523, %v1488, 0
      %v1528 = vsel %vm1523, %v1489, 0
      %v1531 = vsel %vm1108, %v1520, 0
      %v1534 = vsel %vm1108, %v1521, 0
      %v1537 = vsel %vm1108, %v1522, 0
      %1539 = vmatprep.subr.mxu0 %v1491
      %1540 = vmatpush1.msra.mxu0 %v1490
      %1541 = vmatprep.subr.mxu0 %v1494
      %1542 = vmatpush1.msra.mxu0 %v1493
      %1543 = vmatprep.subr.mxu0 %v1497
      %1544 = vmatpush1.msra.mxu0 %v1496
      %1545 = vmatprep.subr.mxu0 %v1500
      %1546 = vmatpush1.msra.mxu0 %v1499
      %1547 = vmatprep.subr.mxu0 %v1503
      %1548 = vmatpush1.msra.mxu0 %v1502
      %1549 = vmatprep.subr.mxu0 %v1506
      %1550 = vmatpush1.msra.mxu0 %v1505
      %1551 = vmatprep.subr.mxu0 %v1509
      %1552 = vmatpush1.msra.mxu0 %v1508
      %1553 = vmatprep.subr.mxu0 %v1512
      %1554 = vmatpush1.msra.mxu0 %v1511
      %1555 = vmatprep.subr.mxu0 %v1515
      %1556 = vmatpush1.msra.mxu0 %v1514
      %1557 = vmatprep.subr.mxu0 %v1518
      %1558 = vmatpush1.msra.mxu0 %v1517
      %1559 = vmatprep.subr.mxu0 %v1534
      %1560 = vmatpush1.msra.mxu0 %v1531
      %1561 = vmatprep.subr.mxu0 0.0
      %1562 = vmatpush1.msra.mxu0 0.0
      %1563 = vmatprep.subr.mxu0 0.0
      %1564 = vmatpush1.msra.mxu0 0.0
      %1565 = vmatprep.subr.mxu0 0.0
      %1566 = vmatpush1.msra.mxu0 0.0
      %1567 = vmatprep.subr.mxu0 0.0
      %1568 = vmatpush1.msra.mxu0 0.0
      %1569 = vmatprep.subr.mxu0 0.0
      %1570 = vmatpush1.msra.mxu0 0.0
      %1571 = vmatprep.subr.mxu0 0.0
      %1572 = vmatpush1.msra.mxu0 0.0
      %1573 = vmatprep.subr.mxu0 0.0
      %1574 = vmatpush1.msra.mxu0 0.0
      %1575 = vmatprep.subr.mxu0 0.0
      %1576 = vmatpush1.msra.mxu0 0.0
      %1577 = vmatprep.subr.mxu0 0.0
      %1578 = vmatpush1.msra.mxu0 0.0
      %1579 = vmatprep.subr.mxu0 0.0
      %1580 = vmatpush1.msra.mxu0 0.0
      %1581 = vmatprep.subr.mxu0 0.0
      %1582 = vmatpush1.msra.mxu0 0.0
      %1583 = vmatprep.subr.mxu0 0.0
      %1584 = vmatpush1.msra.mxu0 0.0
      %1585 = vmatprep.subr.mxu0 0.0
      %1586 = vmatpush1.msra.mxu0 0.0
      %1587 = vmatprep.subr.mxu0 0.0
      %1588 = vmatpush1.msra.mxu0 0.0
      %1589 = vmatprep.subr.mxu0 0.0
      %1590 = vmatpush1.msra.mxu0 0.0
      %1591 = vmatprep.subr.mxu0 0.0
      %1592 = vmatpush1.msra.mxu0 0.0
      %1593 = vmatprep.subr.mxu0 0.0
      %1594 = vmatpush1.msra.mxu0 0.0
      %1595 = vmatprep.subr.mxu0 0.0
      %1596 = vmatpush1.msra.mxu0 0.0
      %1597 = vmatprep.subr.mxu0 0.0
      %1598 = vmatpush1.msra.mxu0 0.0
      %1599 = vmatprep.subr.mxu0 0.0
      %1600 = vmatpush1.msra.mxu0 0.0
      %1601 = vmatprep.subr.mxu0 0.0
      %1602 = vmatpush1.msra.mxu0 0.0
      %1603 = vmatprep.mubr.f32.mxu0 0.0
      %1604 = vmatmul.mubr.f32.gmra.mrb[0].mxu0 %v1525
      %v1605 = vpop.f32.mrb[0].mxu0
      %v1606 = vadd.f32 0.0, %v1605
      %v1607 = vpop.f32.mrb[0].mxu0
      %v1608 = vadd.f32 0.0, %v1607
      %1609 = vmatprep.mubr.f32.mxu0 0.0
      %1610 = vmatmul.mubr.f32.gmra.mrb[0].mxu0 %v1528
      %v1611 = vpop.f32.mrb[0].mxu0
      %v1612 = vadd.f32 0.0, %v1611
      %v1613 = vpop.f32.mrb[0].mxu0
      %v1614 = vadd.f32 0.0, %v1613
      %1615 = vdwg.mxu0
      %1616 = vmatprep.subr.mxu0 0.0
      %1617 = vmatpush1.msra.mxu0 %v1492
      %1618 = vmatprep.subr.mxu0 0.0
      %1619 = vmatpush1.msra.mxu0 %v1495
      %1620 = vmatprep.subr.mxu0 0.0
      %1621 = vmatpush1.msra.mxu0 %v1498
      %1622 = vmatprep.subr.mxu0 0.0
      %1623 = vmatpush1.msra.mxu0 %v1501
      %1624 = vmatprep.subr.mxu0 0.0
      %1625 = vmatpush1.msra.mxu0 %v1504
      %1626 = vmatprep.subr.mxu0 0.0
      %1627 = vmatpush1.msra.mxu0 %v1507
      %1628 = vmatprep.subr.mxu0 0.0
      %1629 = vmatpush1.msra.mxu0 %v1510
      %1630 = vmatprep.subr.mxu0 0.0
      %1631 = vmatpush1.msra.mxu0 %v1513
      %1632 = vmatprep.subr.mxu0 0.0
      %1633 = vmatpush1.msra.mxu0 %v1516
      %1634 = vmatprep.subr.mxu0 0.0
      %1635 = vmatpush1.msra.mxu0 %v1519
      %1636 = vmatprep.subr.mxu0 0.0
      %1637 = vmatpush1.msra.mxu0 %v1537
      %1638 = vmatprep.subr.mxu0 0.0
      %1639 = vmatpush1.msra.mxu0 0.0
      %1640 = vmatprep.subr.mxu0 0.0
      %1641 = vmatpush1.msra.mxu0 0.0
      %1642 = vmatprep.subr.mxu0 0.0
      %1643 = vmatpush1.msra.mxu0 0.0
      %1644 = vmatprep.subr.mxu0 0.0
      %1645 = vmatpush1.msra.mxu0 0.0
      %1646 = vmatprep.subr.mxu0 0.0
      %1647 = vmatpush1.msra.mxu0 0.0
      %1648 = vmatprep.subr.mxu0 0.0
      %1649 = vmatpush1.msra.mxu0 0.0
      %1650 = vmatprep.subr.mxu0 0.0
      %1651 = vmatpush1.msra.mxu0 0.0
      %1652 = vmatprep.subr.mxu0 0.0
      %1653 = vmatpush1.msra.mxu0 0.0
      %1654 = vmatprep.subr.mxu0 0.0
      %1655 = vmatpush1.msra.mxu0 0.0
      %1656 = vmatprep.subr.mxu0 0.0
      %1657 = vmatpush1.msra.mxu0 0.0
      %1658 = vmatprep.subr.mxu0 0.0
      %1659 = vmatpush1.msra.mxu0 0.0
      %1660 = vmatprep.subr.mxu0 0.0
      %1661 = vmatpush1.msra.mxu0 0.0
      %1662 = vmatprep.subr.mxu0 0.0
      %1663 = vmatpush1.msra.mxu0 0.0
      %1664 = vmatprep.subr.mxu0 0.0
      %1665 = vmatpush1.msra.mxu0 0.0
      %1666 = vmatprep.subr.mxu0 0.0
      %1667 = vmatpush1.msra.mxu0 0.0
      %1668 = vmatprep.subr.mxu0 0.0
      %1669 = vmatpush1.msra.mxu0 0.0
      %1670 = vmatprep.subr.mxu0 0.0
      %1671 = vmatpush1.msra.mxu0 0.0
      %1672 = vmatprep.subr.mxu0 0.0
      %1673 = vmatpush1.msra.mxu0 0.0
      %1674 = vmatprep.subr.mxu0 0.0
      %1675 = vmatpush1.msra.mxu0 0.0
      %1676 = vmatprep.subr.mxu0 0.0
      %1677 = vmatpush1.msra.mxu0 0.0
      %1678 = vmatprep.subr.mxu0 0.0
      %1679 = vmatpush1.msra.mxu0 0.0
      %1680 = vmatprep.mubr.f32.mxu0 0.0
      %1681 = vmatmul.mubr.f32.gmra.mrb[0].mxu0 %v1525
      %v1682 = vpop.f32.mrb[0].mxu0
      %v1683 = vadd.f32 0.0, %v1682
      %v1684 = vpop.f32.mrb[0].mxu0
      %1685 = vmatprep.mubr.f32.mxu0 0.0
      %1686 = vmatmul.mubr.f32.gmra.mrb[0].mxu0 %v1528
      %v1687 = vpop.f32.mrb[0].mxu0
      %v1688 = vadd.f32 0.0, %v1687
      %v1689 = vpop.f32.mrb[0].mxu0
      %1690 = vdwg.mxu0
      %vm1691 = vcmp.ge.f32.partialorder %v1612, 0.01
      %vm1692 = vcmp.ge.f32.partialorder %v1614, 0.01
      %vm1693 = vcmp.ge.f32.partialorder %v1688, 0.01
      %v1694 = vsel %vm1691, 1, 0
      %v1695 = vsel %vm1692, 1, 0
      %v1696 = vsel %vm1693, 1, 0
      %v1697 = vcvt.s32.f32 %v1694
      %v1698 = vcvt.s32.f32 %v1695
      %v1699 = vcvt.s32.f32 %v1696
      %v1700 = vadd.f32 %v1612, 1e-08
      %v1701 = vadd.f32 %v1614, 1e-08
      %v1702 = vadd.f32 %v1688, 1e-08
      %v1703 = vrcp.pop %v1700
      %v1704 = vrcp.pop %v1701
      %v1705 = vrcp.pop %v1702
      %v1706 = vlaneseq
      %v1707 = vshrl.u32 %v1706, 7
      %v1708 = vsub.s32 0, %v1707
      %v1709 = vrot.slane %v1703, %v1708
      %v1710 = vlaneseq
      %v1711 = vshrl.u32 %v1710, 7
      %v1712 = vsub.s32 0, %v1711
      %v1713 = vrot.slane %v1704, %v1712
      %v1714 = vlaneseq
      %v1715 = vshrl.u32 %v1714, 7
      %v1716 = vsub.s32 0, %v1715
      %v1717 = vrot.slane %v1705, %v1716
      %v1718 = vmul.f32 %v1606, %v1709
      %v1719 = vmul.f32 %v1608, %v1713
      %v1720 = vmul.f32 %v1683, %v1717
      %v1721 = vld [vmem:[%s6] sm:$0xff]
      %1723 = vset.pattern.permute.xlu0 0
      %1724 = vperm.xlu0 %1723, %v1721
      %v1725 = vpop.permute.xlu0 %1724
      %v1727 = vadd.f32 %v1718, %v1725
      %v1728 = vadd.f32 %v1719, %v1725
      %v1729 = vadd.f32 %v1720, %v1725
      %v1730 = vlaneseq
      %v1731 = vshrl.u32 %v1730, 7
      %v1732 = vsub.s32 0, %v1731
      %v1733 = vrot.slane %v1697, %v1732
      %v1734 = vlaneseq
      %v1735 = vshrl.u32 %v1734, 7
      %v1736 = vsub.s32 0, %v1735
      %v1737 = vrot.slane %v1698, %v1736
      %v1738 = vlaneseq
      %v1739 = vshrl.u32 %v1738, 7
      %v1740 = vsub.s32 0, %v1739
      %v1741 = vrot.slane %v1699, %v1740
      %v1742 = vmul.f32 %v1727, %v1733
      %v1743 = vmul.f32 %v1728, %v1737
      %v1744 = vmul.f32 %v1729, %v1741
      %v1745 = vmax.f32 %v1742, 0.0
      %v1746 = vmax.f32 %v1743, 0.0
      %v1747 = vmax.f32 %v1744, 0.0
      %1748 = vst [vmem:[%s367] sm:$0xff] %v1745
      %1749 = vst [vmem:[%s367 + $0x8] sm:$0xff] %v1746
      %1750 = vst.msk [vmem:[%s367 + $0x10] sm:$0xff] %vm1091, %v1747
      %v1754 = vcombine.low %v1697, %v1698
      %v1756 = vunpack.c.l.s4 1966171168
      %v1757 = vunpack.c.0.s8 %v1756
      %v1758 = vlaneseq
      %v1759 = vshrl.u32 %v1758, 7
      %v1760 = vsub.s32 %v1757, %v1759
      %v1761 = vrot.slane %v1754, %v1760
      %v1763 = vunpack.c.l.s4 1966171168
      %v1764 = vunpack.c.0.s8 %v1763
      %v1765 = vlaneseq
      %v1766 = vshrl.u32 %v1765, 7
      %v1767 = vsub.s32 %v1764, %v1766
      %v1768 = vrot.slane %v1699, %v1767
      %v1769 = vcombine.low %v1761, %v1768
      %v1771 = vunpack.c.l.s4 1966171168
      %v1772 = vunpack.c.0.s8 %v1771
      %v1773 = vlaneseq
      %v1774 = vshrl.u32 %v1773, 7
      %v1775 = vsub.s32 %v1772, %v1774
      %v1776 = vrot.slane %v1769, %v1775
      %vm1778 = vcmp.ge.s32.totalorder %v1076, 0
      %vm1779 = vcmp.lt.s32.totalorder %v1076, 288
      %vm1780 = vmand %vm1778, %vm1779
      %s1781 = scalar_lea.vmem %s367, 24
      %1782 = vst.msk [vmem:[%s1781] ss:$8 sm:$0x7] %vm1780, %v1776
      %1783 = vst.msk [vmem:[%s1781] ss:$8 sm:$0x0] %vm1780, %v1776
      %1784 = vst [vmem:[#allocation4] sm:$0xff] 0.0
      %1785 = vst [vmem:[#allocation4 + $0x8] sm:$0xff] 0.0
      %vm1786 = vcmask 416768
      %1787 = vst.msk [vmem:[#allocation4 + $0x10] sm:$0xff] %vm1786, 0.0
      %1788 = vst [vmem:[#allocation4 + $0x18] sm:$0x1] 0.0
      %1789 = vst [vmem:[#allocation4 + $0x20] sm:$0x1] 0.0
      %vm1790 = vcmask 409600
      %1791 = vst.msk [vmem:[#allocation4 + $0x28] sm:$0x1] %vm1790, 0.0
      %1792 = vst [vmem:[#allocation4] sm:$0xff] %v1745
      %1793 = vst [vmem:[#allocation4 + $0x8] sm:$0xff] %v1746
      %1794 = vst.msk [vmem:[#allocation4 + $0x10] sm:$0xff] %vm1091, %v1747
      %s1795 = scalar_lea.vmem [#allocation4], 24
      %1796 = vst.msk [vmem:[%s1795] ss:$8 sm:$0x7] %vm1780, %v1776
      %1797 = vst.msk [vmem:[%s1795] ss:$8 sm:$0x0] %vm1780, %v1776
      %v1798 = vld [vmem:[#allocation4] sm:$0xff]
      %v1799 = vld [vmem:[#allocation4 + $0x8] sm:$0xff]
      %v1800 = vld [vmem:[#allocation4 + $0x10] sm:$0xff]
      %v1801 = vld [vmem:[#allocation4 + $0x18] sm:$0x1]
      %v1802 = vld [vmem:[#allocation4 + $0x20] sm:$0x1]
      %v1803 = vld [vmem:[#allocation4 + $0x28] sm:$0x1]
      %1810 = vrot.lane.b32.xlu0 %v1798, 127
      %v1811 = vpop.permute.xlu0 %1810
      %1812 = vrot.lane.b32.xlu0 %v1799, 127
      %v1813 = vpop.permute.xlu0 %1812
      %1814 = vrot.lane.b32.xlu0 %v1800, 127
      %v1815 = vpop.permute.xlu0 %1814
      %1816 = vrot.lane.b32.xlu0 %v1801, 127
      %v1817 = vpop.permute.xlu0 %1816
      %1818 = vrot.lane.b32.xlu0 %v1802, 127
      %v1819 = vpop.permute.xlu0 %1818
      %1820 = vrot.lane.b32.xlu0 %v1803, 127
      %v1821 = vpop.permute.xlu0 %1820
      %v1822 = vsel %vm396, %v1811, %v1813
      %v1823 = vsel %vm396, %v1813, %v1815
      %v1824 = vsel %vm396, %v1817, %v1819
      %v1825 = vsel %vm396, %v1819, %v1821
      %v1832 = vmax.f32 %v1798, %v1822
      %v1833 = vmax.f32 %v1799, %v1823
      %v1834 = vmax.f32 %v1800, %v1815
      %v1835 = vmax.f32 %v1801, %v1824
      %v1836 = vmax.f32 %v1802, %v1825
      %v1837 = vmax.f32 %v1803, %v1821
      %1838 = vrot.lane.b32.xlu0 %v1798, 110
      %v1839 = vpop.permute.xlu0 %1838
      %1840 = vrot.lane.b32.xlu0 %v1799, 110
      %v1841 = vpop.permute.xlu0 %1840
      %1842 = vrot.lane.b32.xlu0 %v1800, 110
      %v1843 = vpop.permute.xlu0 %1842
      %1844 = vrot.lane.b32.xlu0 %v1801, 110
      %v1845 = vpop.permute.xlu0 %1844
      %1846 = vrot.lane.b32.xlu0 %v1802, 110
      %v1847 = vpop.permute.xlu0 %1846
      %1848 = vrot.lane.b32.xlu0 %v1803, 110
      %v1849 = vpop.permute.xlu0 %1848
      %v1850 = vsel %vm450, %v1839, %v1841
      %v1851 = vsel %vm450, %v1841, %v1843
      %v1852 = vsel %vm450, %v1845, %v1847
      %v1853 = vsel %vm450, %v1847, %v1849
      %v1860 = vmax.f32 %v1832, %v1850
      %v1861 = vmax.f32 %v1833, %v1851
      %v1862 = vmax.f32 %v1834, %v1843
      %v1863 = vmax.f32 %v1835, %v1852
      %v1864 = vmax.f32 %v1836, %v1853
      %v1865 = vmax.f32 %v1837, %v1849
      %1866 = vrot.lane.b32.xlu0 %v1798, 109
      %v1867 = vpop.permute.xlu0 %1866
      %1868 = vrot.lane.b32.xlu0 %v1799, 109
      %v1869 = vpop.permute.xlu0 %1868
      %1870 = vrot.lane.b32.xlu0 %v1800, 109
      %v1871 = vpop.permute.xlu0 %1870
      %1872 = vrot.lane.b32.xlu0 %v1801, 109
      %v1873 = vpop.permute.xlu0 %1872
      %1874 = vrot.lane.b32.xlu0 %v1802, 109
      %v1875 = vpop.permute.xlu0 %1874
      %1876 = vrot.lane.b32.xlu0 %v1803, 109
      %v1877 = vpop.permute.xlu0 %1876
      %v1878 = vsel %vm479, %v1867, %v1869
      %v1879 = vsel %vm479, %v1869, %v1871
      %v1880 = vsel %vm479, %v1873, %v1875
      %v1881 = vsel %vm479, %v1875, %v1877
      %v1888 = vmax.f32 %v1860, %v1878
      %v1889 = vmax.f32 %v1861, %v1879
      %v1890 = vmax.f32 %v1862, %v1871
      %v1891 = vmax.f32 %v1863, %v1880
      %v1892 = vmax.f32 %v1864, %v1881
      %v1893 = vmax.f32 %v1865, %v1877
      %v1894 = vld [vmem:[%s8] sm:$0xff]
      %v1895 = vld [vmem:[%s8 + $0x8] sm:$0xff]
      %v1896 = vld [vmem:[%s8 + $0x10] sm:$0xff]
      %v1897 = vld [vmem:[%s8 + $0x18] sm:$0xff]
      %v1898 = vld [vmem:[%s8 + $0x20] sm:$0xff]
      %v1899 = vld [vmem:[%s8 + $0x28] sm:$0xff]
      %v1900 = vld [vmem:[%s8 + $0x30] sm:$0xff]
      %v1901 = vld [vmem:[%s8 + $0x38] sm:$0xff]
      %v1902 = vld [vmem:[%s8 + $0x40] sm:$0xff]
      %v1903 = vld [vmem:[%s8 + $0x48] sm:$0xff]
      %v1904 = vld [vmem:[%s8 + $0x50] sm:$0xff]
      %v1905 = vld [vmem:[%s8 + $0x58] sm:$0xff]
      %v1906 = vld [vmem:[%s8 + $0x60] sm:$0xff]
      %v1907 = vld [vmem:[%s8 + $0x68] sm:$0xff]
      %v1908 = vld [vmem:[%s8 + $0x70] sm:$0xff]
      %v1909 = vld [vmem:[%s8 + $0x78] sm:$0xff]
      %v1910 = vld [vmem:[%s8 + $0x80] sm:$0xff]
      %v1911 = vld [vmem:[%s8 + $0x88] sm:$0xff]
      %v1912 = vld [vmem:[%s8 + $0x90] sm:$0xff]
      %v1913 = vld [vmem:[%s8 + $0x98] sm:$0xff]
      %v1914 = vld [vmem:[%s8 + $0xa0] sm:$0xff]
      %v1915 = vld [vmem:[%s8 + $0xa8] sm:$0xff]
      %v1916 = vld [vmem:[%s8 + $0xb0] sm:$0xff]
      %v1917 = vld [vmem:[%s8 + $0xb8] sm:$0xff]
      %v1918 = vld [vmem:[%s8 + $0xc0] sm:$0xff]
      %v1919 = vld [vmem:[%s8 + $0xc8] sm:$0xff]
      %v1920 = vld [vmem:[%s8 + $0xd0] sm:$0xff]
      %v1921 = vld [vmem:[%s8 + $0xd8] sm:$0xff]
      %v1922 = vld [vmem:[%s8 + $0xe0] sm:$0xff]
      %v1923 = vld [vmem:[%s8 + $0xe8] sm:$0xff]
      %v1924 = vld [vmem:[%s8 + $0xf0] sm:$0xff]
      %v1925 = vld [vmem:[%s8 + $0xf8] sm:$0xff]
      %v1926 = vld [vmem:[%s8 + $0x100] sm:$0xff]
      %v1927 = vld [vmem:[%s8 + $0x108] sm:$0xff]
      %v1928 = vld [vmem:[%s8 + $0x110] sm:$0xff]
      %v1929 = vld [vmem:[%s8 + $0x118] sm:$0xff]
      %v1931 = vsel %vm1091, %v1890, 0
      %v1934 = vsel %vm1091, %v1893, 0
      %1936 = vmatprep.subr.mxu0 0.0
      %1937 = vmatpush1.msra.mxu0 %v1894
      %1938 = vmatprep.subr.mxu0 0.0
      %1939 = vmatpush1.msra.mxu0 %v1895
      %1940 = vmatprep.subr.mxu0 0.0
      %1941 = vmatpush1.msra.mxu0 %v1896
      %1942 = vmatprep.subr.mxu0 0.0
      %1943 = vmatpush1.msra.mxu0 %v1897
      %1944 = vmatprep.subr.mxu0 0.0
      %1945 = vmatpush1.msra.mxu0 %v1898
      %1946 = vmatprep.subr.mxu0 0.0
      %1947 = vmatpush1.msra.mxu0 %v1899
      %1948 = vmatprep.subr.mxu0 0.0
      %1949 = vmatpush1.msra.mxu0 %v1900
      %1950 = vmatprep.subr.mxu0 0.0
      %1951 = vmatpush1.msra.mxu0 %v1901
      %1952 = vmatprep.subr.mxu0 0.0
      %1953 = vmatpush1.msra.mxu0 %v1902
      %1954 = vmatprep.subr.mxu0 0.0
      %1955 = vmatpush1.msra.mxu0 %v1903
      %1956 = vmatprep.subr.mxu0 0.0
      %1957 = vmatpush1.msra.mxu0 %v1904
      %1958 = vmatprep.subr.mxu0 0.0
      %1959 = vmatpush1.msra.mxu0 %v1905
      %1960 = vmatprep.subr.mxu0 0.0
      %1961 = vmatpush1.msra.mxu0 %v1906
      %1962 = vmatprep.subr.mxu0 0.0
      %1963 = vmatpush1.msra.mxu0 %v1907
      %1964 = vmatprep.subr.mxu0 0.0
      %1965 = vmatpush1.msra.mxu0 %v1908
      %1966 = vmatprep.subr.mxu0 0.0
      %1967 = vmatpush1.msra.mxu0 %v1909
      %1968 = vmatprep.subr.mxu0 0.0
      %1969 = vmatpush1.msra.mxu0 %v1910
      %1970 = vmatprep.subr.mxu0 0.0
      %1971 = vmatpush1.msra.mxu0 %v1911
      %1972 = vmatprep.subr.mxu0 0.0
      %1973 = vmatpush1.msra.mxu0 %v1912
      %1974 = vmatprep.subr.mxu0 0.0
      %1975 = vmatpush1.msra.mxu0 %v1913
      %1976 = vmatprep.subr.mxu0 0.0
      %1977 = vmatpush1.msra.mxu0 %v1914
      %1978 = vmatprep.subr.mxu0 0.0
      %1979 = vmatpush1.msra.mxu0 %v1915
      %1980 = vmatprep.subr.mxu0 0.0
      %1981 = vmatpush1.msra.mxu0 %v1916
      %1982 = vmatprep.subr.mxu0 0.0
      %1983 = vmatpush1.msra.mxu0 %v1917
      %1984 = vmatprep.subr.mxu0 0.0
      %1985 = vmatpush1.msra.mxu0 %v1918
      %1986 = vmatprep.subr.mxu0 0.0
      %1987 = vmatpush1.msra.mxu0 %v1919
      %1988 = vmatprep.subr.mxu0 0.0
      %1989 = vmatpush1.msra.mxu0 %v1920
      %1990 = vmatprep.subr.mxu0 0.0
      %1991 = vmatpush1.msra.mxu0 %v1921
      %1992 = vmatprep.subr.mxu0 0.0
      %1993 = vmatpush1.msra.mxu0 %v1922
      %1994 = vmatprep.subr.mxu0 0.0
      %1995 = vmatpush1.msra.mxu0 %v1923
      %1996 = vmatprep.subr.mxu0 0.0
      %1997 = vmatpush1.msra.mxu0 %v1924
      %1998 = vmatprep.subr.mxu0 0.0
      %1999 = vmatpush1.msra.mxu0 %v1925
      %2000 = vmatprep.mubr.f32.mxu0 %v1889
      %2001 = vmatmul.mubr.f32.gmra.mrb[0].mxu0 %v1888
      %v2002 = vpop.f32.mrb[0].mxu0
      %v2003 = vadd.f32 0.0, %v2002
      %v2004 = vpop.f32.mrb[0].mxu0
      %2005 = vmatprep.mubr.f32.mxu0 %v1892
      %2006 = vmatmul.mubr.f32.gmra.mrb[0].mxu0 %v1891
      %v2007 = vpop.f32.mrb[0].mxu0
      %v2008 = vadd.f32 0.0, %v2007
      %v2009 = vpop.f32.mrb[0].mxu0
      %2010 = vdwg.mxu0
      %2011 = vmatprep.subr.mxu0 0.0
      %2012 = vmatpush1.msra.mxu0 %v1926
      %2013 = vmatprep.subr.mxu0 0.0
      %2014 = vmatpush1.msra.mxu0 %v1927
      %2015 = vmatprep.subr.mxu0 0.0
      %2016 = vmatpush1.msra.mxu0 %v1928
      %2017 = vmatprep.subr.mxu0 0.0
      %2018 = vmatpush1.msra.mxu0 %v1929
      %2019 = vmatprep.subr.mxu0 0.0
      %2020 = vmatpush1.msra.mxu0 0.0
      %2021 = vmatprep.subr.mxu0 0.0
      %2022 = vmatpush1.msra.mxu0 0.0
      %2023 = vmatprep.subr.mxu0 0.0
      %2024 = vmatpush1.msra.mxu0 0.0
      %2025 = vmatprep.subr.mxu0 0.0
      %2026 = vmatpush1.msra.mxu0 0.0
      %2027 = vmatprep.subr.mxu0 0.0
      %2028 = vmatpush1.msra.mxu0 0.0
      %2029 = vmatprep.subr.mxu0 0.0
      %2030 = vmatpush1.msra.mxu0 0.0
      %2031 = vmatprep.subr.mxu0 0.0
      %2032 = vmatpush1.msra.mxu0 0.0
      %2033 = vmatprep.subr.mxu0 0.0
      %2034 = vmatpush1.msra.mxu0 0.0
      %2035 = vmatprep.subr.mxu0 0.0
      %2036 = vmatpush1.msra.mxu0 0.0
      %2037 = vmatprep.subr.mxu0 0.0
      %2038 = vmatpush1.msra.mxu0 0.0
      %2039 = vmatprep.subr.mxu0 0.0
      %2040 = vmatpush1.msra.mxu0 0.0
      %2041 = vmatprep.subr.mxu0 0.0
      %2042 = vmatpush1.msra.mxu0 0.0
      %2043 = vmatprep.subr.mxu0 0.0
      %2044 = vmatpush1.msra.mxu0 0.0
      %2045 = vmatprep.subr.mxu0 0.0
      %2046 = vmatpush1.msra.mxu0 0.0
      %2047 = vmatprep.subr.mxu0 0.0
      %2048 = vmatpush1.msra.mxu0 0.0
      %2049 = vmatprep.subr.mxu0 0.0
      %2050 = vmatpush1.msra.mxu0 0.0
      %2051 = vmatprep.subr.mxu0 0.0
      %2052 = vmatpush1.msra.mxu0 0.0
      %2053 = vmatprep.subr.mxu0 0.0
      %2054 = vmatpush1.msra.mxu0 0.0
      %2055 = vmatprep.subr.mxu0 0.0
      %2056 = vmatpush1.msra.mxu0 0.0
      %2057 = vmatprep.subr.mxu0 0.0
      %2058 = vmatpush1.msra.mxu0 0.0
      %2059 = vmatprep.subr.mxu0 0.0
      %2060 = vmatpush1.msra.mxu0 0.0
      %2061 = vmatprep.subr.mxu0 0.0
      %2062 = vmatpush1.msra.mxu0 0.0
      %2063 = vmatprep.subr.mxu0 0.0
      %2064 = vmatpush1.msra.mxu0 0.0
      %2065 = vmatprep.subr.mxu0 0.0
      %2066 = vmatpush1.msra.mxu0 0.0
      %2067 = vmatprep.subr.mxu0 0.0
      %2068 = vmatpush1.msra.mxu0 0.0
      %2069 = vmatprep.subr.mxu0 0.0
      %2070 = vmatpush1.msra.mxu0 0.0
      %2071 = vmatprep.subr.mxu0 0.0
      %2072 = vmatpush1.msra.mxu0 0.0
      %2073 = vmatprep.subr.mxu0 0.0
      %2074 = vmatpush1.msra.mxu0 0.0
      %2075 = vmatprep.mubr.f32.mxu0 0.0
      %2076 = vmatmul.mubr.f32.gmra.mrb[0].mxu0 %v1931
      %v2077 = vpop.f32.mrb[0].mxu0
      %v2078 = vadd.f32 %v2003, %v2077
      %v2079 = vpop.f32.mrb[0].mxu0
      %2080 = vmatprep.mubr.f32.mxu0 0.0
      %2081 = vmatmul.mubr.f32.gmra.mrb[0].mxu0 %v1934
      %v2082 = vpop.f32.mrb[0].mxu0
      %v2083 = vadd.f32 %v2008, %v2082
      %v2084 = vpop.f32.mrb[0].mxu0
      %2085 = vdwg.mxu0
      %vm2086 = vcmask 523264
      %2087 = vst.msk [vmem:[%s372] sm:$0xff] %vm2086, %v2078
      %vm2088 = vcmask 516096
      %2089 = vst.msk [vmem:[%s372 + $0x8] sm:$0x1] %vm2088, %v2083
      %p2090 = scmp.lt.s32.totalorder %s22, 1
      %s2091 = scalar_select %p2090, %s22, 1
      %s2092 = smul.addr %s2091, 6
      %s2093 = smul.addr %s2092, 8
      %s2094 = scalar_lea.vmem %s9, %s2093
      %p2095 = scmp.lt.s32.totalorder %s22, 1
      %s2096 = scalar_select %p2095, %s22, 1
      %s2097 = smul.addr %s2096, 2
      %s2098 = smul.addr %s2097, 8
      %s2099 = scalar_lea.vmem %s10, %s2098
      // Predicated region
      $region57: #{_lambda_.1} parent=55 // pred_check
        %p2100 = pneg %p234
      $region58: #{_lambda_.1} parent=55 // pred_check_branch
        %2102 = sbr.rel (%p2100) target = $region60
      $region59: #{_lambda_.1} parent=55 // pred_region
        _
      $region60: #{_lambda_.1} parent=55 // pred_fallthru
        _
      // Predicated region
      $region61: #{_lambda_.1} parent=55 // pred_check
        %p2103 = pneg %p260
      $region62: #{_lambda_.1} parent=55 // pred_check_branch
        %2105 = sbr.rel (%p2103) target = $region64
      $region63: #{_lambda_.1} parent=55 // pred_region
        _
      $region64: #{_lambda_.1} parent=55 // pred_fallthru
        _
    $region56: #{_lambda_.1} parent=5 // pred_fallthru
      _
    %p2106 = scmp.le.s32.totalorder 2, %s17
    // Predicated region
    $region65: #{_lambda_.1} parent=5 // pred_check
      %p2107 = pneg %p2106
    $region66: #{_lambda_.1} parent=5 // pred_check_branch
      %2109 = sbr.rel (%p2107) target = $region68
    $region67: #{_lambda_.1} parent=5 // pred_region
      %s2110 = ssub.s32 %s17, 2
      // Predicated region
      $region69: #{_lambda_.1} parent=67 // pred_check
        %p2111 = pneg %p240
      $region70: #{_lambda_.1} parent=67 // pred_check_branch
        %2113 = sbr.rel (%p2111) target = $region72
      $region71: #{_lambda_.1} parent=67 // pred_region
        %p2114 = scmp.lt.s32.totalorder %s23, 1
        %s2115 = scalar_select %p2114, %s23, 1
        %s2116 = smul.addr %s2115, 6
        %s2117 = smul.addr %s2116, 8
        %s2118 = scalar_lea.vmem %s9, %s2117
      $region72: #{_lambda_.1} parent=67 // pred_fallthru
        _
      // Predicated region
      $region73: #{_lambda_.1} parent=67 // pred_check
        %p2119 = pneg %p266
      $region74: #{_lambda_.1} parent=67 // pred_check_branch
        %2121 = sbr.rel (%p2119) target = $region76
      $region75: #{_lambda_.1} parent=67 // pred_region
        %p2122 = scmp.lt.s32.totalorder %s23, 1
        %s2123 = scalar_select %p2122, %s23, 1
        %s2124 = smul.addr %s2123, 2
        %s2125 = smul.addr %s2124, 8
        %s2126 = scalar_lea.vmem %s10, %s2125
      $region76: #{_lambda_.1} parent=67 // pred_fallthru
        _
    $region68: #{_lambda_.1} parent=5 // pred_fallthru
      _
  $region6: #{_lambda_.1} parent=0 // loop_footer
    %s21 = sadd.s32 1, %s17
  $region7: #{_lambda_.1} parent=0 // loop_footer_branch
    %16 = sbr.rel target = $region3
  $region8: #{_lambda_.1} parent=0 // loop_exit
    _

</llo_original>
